<compile_context>
chip_gen: v6e
topology: v6e:2x2x1
jax: 0.10.0
libtpu: 0.0.40
codegen_flags: <defaults>
</compile_context>

<pallas_src>
import jax
import jax.numpy as jnp
from jax.experimental import pallas as pl
from jax.experimental.pallas import tpu as pltpu


def mlp_kernel(x_ref, w1_ref, b1_ref, w2_ref, b2_ref, o_ref):
    # Cast x to bf16 in-kernel (VPU work hidden under the tile DMA).
    x_bf = x_ref[...].astype(jnp.bfloat16)
    # Layer 1: x @ W1 on the MXU, f32 accumulation; bias + ReLU in f32.
    h = jnp.dot(x_bf, w1_ref[...], preferred_element_type=jnp.float32)
    h = jnp.maximum(h + b1_ref[...], 0.0)          # b1 is (1, H) -> broadcasts over rows
    # Dropout(0.2): identity in eval mode.
    # Layer 2: h @ W2 on the MXU, f32 accumulation; bias add in f32.
    out = jnp.dot(h.astype(jnp.bfloat16), w2_ref[...],
                  preferred_element_type=jnp.float32)
    o_ref[...] = (out + b2_ref[...]).astype(o_ref.dtype)


def prepare_params(w1, b1, w2, b2):
    """One-time parameter prep (do this at load time, NOT per forward call):
    bf16 weights for the MXU, (1, H)/(1, O) f32 biases for in-kernel broadcast."""
    return (
        w1.astype(jnp.bfloat16),
        b1.reshape(1, -1).astype(jnp.float32),
        w2.astype(jnp.bfloat16),
        b2.reshape(1, -1).astype(jnp.float32),
    )


def genomics_forward(x, params, *, tb=128, out_dtype=jnp.float32):
    """x: [B, D] f32; params from prepare_params -> [B, O] out_dtype."""
    w1_bf, b1_2d, w2_bf, b2_2d = params
    B, D = x.shape
    H = w1_bf.shape[1]
    O = w2_bf.shape[1]
    tb = min(tb, B)

    grid = (pl.cdiv(B, tb),)
    return pl.pallas_call(
        mlp_kernel,
        out_shape=jax.ShapeDtypeStruct((B, O), out_dtype),
        grid=grid,
        in_specs=[
            pl.BlockSpec((tb, D), lambda i: (i, 0)),   # x: f32, tiled over batch
            pl.BlockSpec((D, H), lambda i: (0, 0)),    # W1 (bf16): resident across steps
            pl.BlockSpec((1, H), lambda i: (0, 0)),    # b1 (f32): resident
            pl.BlockSpec((H, O), lambda i: (0, 0)),    # W2 (bf16): resident
            pl.BlockSpec((1, O), lambda i: (0, 0)),    # b2 (f32): resident
        ],
        out_specs=pl.BlockSpec((tb, O), lambda i: (i, 0)),
        compiler_params=pltpu.CompilerParams(
            dimension_semantics=("parallel",),         # batch tiles are independent
        ),
    )(x, w1_bf, b1_2d, w2_bf, b2_2d)


if __name__ == "__main__":
    # Module-default widths (Linear(1000 -> 256) -> ReLU -> Dropout -> Linear(256 -> 128)).
    # batch=512 with tb=128 -> grid=(4,): >= 2 pipelined steps per TC on v7x.
    batch, input_dim, hidden_dim, output_dim = 512, 1000, 256, 128

    key = jax.random.PRNGKey(0)
    kx, k1, k2, k3, k4 = jax.random.split(key, 5)

    x = jax.random.normal(kx, (batch, input_dim), dtype=jnp.float32)

    # Deterministic parameter init (PyTorch-style uniform bound 1/sqrt(fan_in)).
    bound1 = 1.0 / jnp.sqrt(jnp.float32(input_dim))
    bound2 = 1.0 / jnp.sqrt(jnp.float32(hidden_dim))
    w1 = jax.random.uniform(k1, (input_dim, hidden_dim), jnp.float32, -bound1, bound1)
    b1 = jax.random.uniform(k2, (hidden_dim,), jnp.float32, -bound1, bound1)
    w2 = jax.random.uniform(k3, (hidden_dim, output_dim), jnp.float32, -bound2, bound2)
    b2 = jax.random.uniform(k4, (output_dim,), jnp.float32, -bound2, bound2)

    # One-time parameter prep (hoisted out of the forward path).
    params = jax.tree_util.tree_map(jax.block_until_ready, prepare_params(w1, b1, w2, b2))

    out = genomics_forward(x, params, tb=128)
    out = jax.block_until_ready(out)

    # Pure-JAX reference following the kernel's precision path:
    # bf16-rounded matmul operands, exact f32 accumulation, f32 epilogue,
    # eval-mode dropout = identity.
    hi = jax.lax.Precision.HIGHEST
    x32 = x.astype(jnp.bfloat16).astype(jnp.float32)
    w132 = w1.astype(jnp.bfloat16).astype(jnp.float32)
    w232 = w2.astype(jnp.bfloat16).astype(jnp.float32)
    h_ref = jnp.maximum(jnp.dot(x32, w132, precision=hi) + b1, 0.0)
    ref = jnp.dot(h_ref.astype(jnp.bfloat16).astype(jnp.float32), w232, precision=hi) + b2

    assert out.shape == (batch, output_dim)
    assert jnp.allclose(out, ref, atol=1e-2, rtol=1e-2), "mismatch vs reference"

    print("KERNEL_OK")
</pallas_src>

<mosaic_0001>
module attributes {stable_mosaic.version = 11 : i64} {
  func.func @mlp_kernel(%arg0: i32, %arg1: memref<128x1000xf32, #tpu.memory_space<vmem>>, %arg2: memref<1000x256xbf16, #tpu.memory_space<vmem>>, %arg3: memref<1x256xf32, #tpu.memory_space<vmem>>, %arg4: memref<256x128xbf16, #tpu.memory_space<vmem>>, %arg5: memref<1x128xf32, #tpu.memory_space<vmem>>, %arg6: memref<128x128xf32, #tpu.memory_space<vmem>>) attributes {dimension_semantics = [#tpu.dimension_semantics<parallel>], iteration_bounds = array<i64: 4>, scalar_prefetch = 0 : i64, scratch_operands = 0 : i64, tpu.core_type = #tpu.core_type<tc>, window_params = [{transform_indices = @transform_0, window_bounds = array<i64: 128, 1000>}, {pipeline_mode = #tpu.pipeline_mode<synchronous>, transform_indices = @transform_1, window_bounds = array<i64: 1000, 256>}, {pipeline_mode = #tpu.pipeline_mode<synchronous>, transform_indices = @transform_2, window_bounds = array<i64: 1, 256>}, {pipeline_mode = #tpu.pipeline_mode<synchronous>, transform_indices = @transform_3, window_bounds = array<i64: 256, 128>}, {pipeline_mode = #tpu.pipeline_mode<synchronous>, transform_indices = @transform_4, window_bounds = array<i64: 1, 128>}, {transform_indices = @transform_5, window_bounds = array<i64: 128, 128>}]} {
    %c0 = arith.constant 0 : index
    %c0_0 = arith.constant 0 : index
    %0 = vector.load %arg1[%c0, %c0_0] : memref<128x1000xf32, #tpu.memory_space<vmem>>, vector<128x1000xf32>
    %1 = arith.truncf %0 : vector<128x1000xf32> to vector<128x1000xbf16>
    %c0_1 = arith.constant 0 : index
    %c0_2 = arith.constant 0 : index
    %2 = vector.load %arg2[%c0_1, %c0_2] : memref<1000x256xbf16, #tpu.memory_space<vmem>>, vector<1000x256xbf16>
    %cst = arith.constant dense<0.000000e+00> : vector<128x256xf32>
    %3 = tpu.matmul %1, %2, %cst {dimension_numbers = #tpu.dot_dimension_numbers<[1], [0], [0], [1], [0, 0, 1, 1], [], []>} : vector<128x1000xbf16>, vector<1000x256xbf16>, vector<128x256xf32> -> vector<128x256xf32>
    %c0_3 = arith.constant 0 : index
    %c0_4 = arith.constant 0 : index
    %4 = vector.load %arg3[%c0_3, %c0_4] : memref<1x256xf32, #tpu.memory_space<vmem>>, vector<1x256xf32>
    %5 = vector.broadcast %4 : vector<1x256xf32> to vector<128x256xf32>
    %6 = arith.addf %3, %5 : vector<128x256xf32>
    %cst_5 = arith.constant 0.000000e+00 : f32
    %7 = vector.broadcast %cst_5 : f32 to vector<128x256xf32>
    %8 = arith.maximumf %6, %7 : vector<128x256xf32>
    %9 = arith.truncf %8 : vector<128x256xf32> to vector<128x256xbf16>
    %c0_6 = arith.constant 0 : index
    %c0_7 = arith.constant 0 : index
    %10 = vector.load %arg4[%c0_6, %c0_7] : memref<256x128xbf16, #tpu.memory_space<vmem>>, vector<256x128xbf16>
    %cst_8 = arith.constant dense<0.000000e+00> : vector<128x128xf32>
    %11 = tpu.matmul %9, %10, %cst_8 {dimension_numbers = #tpu.dot_dimension_numbers<[1], [0], [0], [1], [0, 0, 1, 1], [], []>} : vector<128x256xbf16>, vector<256x128xbf16>, vector<128x128xf32> -> vector<128x128xf32>
    %c0_9 = arith.constant 0 : index
    %c0_10 = arith.constant 0 : index
    %12 = vector.load %arg5[%c0_9, %c0_10] : memref<1x128xf32, #tpu.memory_space<vmem>>, vector<1x128xf32>
    %13 = vector.broadcast %12 : vector<1x128xf32> to vector<128x128xf32>
    %14 = arith.addf %11, %13 : vector<128x128xf32>
    %c0_11 = arith.constant 0 : index
    %c0_12 = arith.constant 0 : index
    %15 = vector.load %arg6[%c0_11, %c0_12] : memref<128x128xf32, #tpu.memory_space<vmem>>, vector<128x128xf32>
    tpu.vector_store %arg6[%c0_11, %c0_12], %14 {strides = array<i32>} : memref<128x128xf32, #tpu.memory_space<vmem>>, vector<128x128xf32>,
    return
  }
  func.func @transform_0(%arg0: i32) -> (i32, i32) {
    %c0_i32 = arith.constant 0 : i32
    %c0_i32_0 = arith.constant 0 : i32
    return %arg0, %c0_i32 : i32, i32
  }
  func.func @transform_1(%arg0: i32) -> (i32, i32) {
    %c0_i32 = arith.constant 0 : i32
    %c0_i32_0 = arith.constant 0 : i32
    %c0_i32_1 = arith.constant 0 : i32
    return %c0_i32, %c0_i32_0 : i32, i32
  }
  func.func @transform_2(%arg0: i32) -> (i32, i32) {
    %c0_i32 = arith.constant 0 : i32
    %c0_i32_0 = arith.constant 0 : i32
    %c0_i32_1 = arith.constant 0 : i32
    return %c0_i32, %c0_i32_0 : i32, i32
  }
  func.func @transform_3(%arg0: i32) -> (i32, i32) {
    %c0_i32 = arith.constant 0 : i32
    %c0_i32_0 = arith.constant 0 : i32
    %c0_i32_1 = arith.constant 0 : i32
    return %c0_i32, %c0_i32_0 : i32, i32
  }
  func.func @transform_4(%arg0: i32) -> (i32, i32) {
    %c0_i32 = arith.constant 0 : i32
    %c0_i32_0 = arith.constant 0 : i32
    %c0_i32_1 = arith.constant 0 : i32
    return %c0_i32, %c0_i32_0 : i32, i32
  }
  func.func @transform_5(%arg0: i32) -> (i32, i32) {
    %c0_i32 = arith.constant 0 : i32
    %c0_i32_0 = arith.constant 0 : i32
    return %arg0, %c0_i32 : i32, i32
  }
}

</mosaic_0001>

<llo_original>
// kernel: tpu_custom_call.1
$region0: #{tpu_custom_call.1}
  #allocation0 [shape = 'u32[]', space=smem, size = 0x4, offset = 0x4, fixed_abs, tag = 'smem constant byte address 0x4 - core index']
  #allocation1 [shape = 'u32[144,128]{1,0:T(1,128)}', space=vmem, size = 0x12000, scoped, tag = 'internal scratch']
  %s0 = inlined_call_operand.vmem [shape: f32[512,1000], index: 0, kind: input, shape index: {}]
  %s1 = inlined_call_operand.vmem [shape: bf16[1000,256], index: 1, kind: input, shape index: {}]
  %s2 = inlined_call_operand.vmem [shape: f32[1,256], index: 2, kind: input, shape index: {}]
  %s3 = inlined_call_operand.vmem [shape: bf16[256,128], index: 3, kind: input, shape index: {}]
  %s4 = inlined_call_operand.vmem [shape: f32[1,128], index: 4, kind: input, shape index: {}]
  %s5 = inlined_call_operand.hbm [shape: f32[512,128], index: 5, kind: output, shape index: {}]
  %s6 = sld [smem:[#allocation0]]
  $region53: #{tpu_custom_call.1} parent=0
    _
  %s8 = ssub.s32 1, %s6
  %s9 = scalar_select 0, %s8, %s6
  $region1: #{tpu_custom_call.1} parent=0
    #allocation2 [shape = 'u8[131072]{0}', space=vmem, size = 0x20000, scoped, tag = 'output window, operand 0']
    #allocation3 [shape = 's32[2]{0}', space=sflag, size = 0x8, scoped, tag = 'scoped memory for tpu_custom_call.1']
    %10 = vsyncpa [#allocation3], 0
    %s11 = scalar_lea.sflag [#allocation3], 1
    %12 = vsyncpa %s11, 0
    loop: start=0, step=1, limit=6
    $region2: #{tpu_custom_call.1} parent=1 // loop_pre_header
      _
    $region3: #{tpu_custom_call.1} parent=1 // loop_header
      %s14 = sphi 0, %s18
      %p15 = scmp.ge.s32.totalorder %s14, 6
      %s24 = sphi 0, %s26
      %s27 = sphi 0, %s24
      %s28 = sphi 0, %s27
      %s44 = sphi 0, %s28
      %s48 = sphi 0, %s48
      %s50 = sphi 0, %s48
      %s51 = sphi 0, %s50
      %s65 = sphi 0, %s51
      %s69 = sphi 0, %s69
      %s71 = sphi 0, %s69
      %s72 = sphi 0, %s71
      %s86 = sphi 0, %s72
      %s90 = sphi 0, %s90
      %s92 = sphi 0, %s90
      %s93 = sphi 0, %s92
      %s107 = sphi 0, %s93
      %s111 = sphi 0, %s111
      %s113 = sphi 0, %s111
      %s114 = sphi 0, %s113
      %s128 = sphi 0, %s114
      %s134 = sphi 0, %s136
      %s137 = sphi 0, %s134
      %s138 = sphi 0, %s137
      %s154 = sphi 0, %s138
    $region4: #{tpu_custom_call.1} parent=1 // loop_header_branch
      %17 = sbr.rel (%p15) target = $region8
    $region5: #{tpu_custom_call.1} parent=1 // loop_body
      %s19 = ssub.s32 %s14, 1
      %s20 = ssub.s32 %s14, 2
      %s21 = sadd.s32 %s14, 1
      %s22 = ssub.s32 %s14, %s21
      %p23 = scmp.eq.s32.totalorder %s22, 0
      %s25 = sadd.s32 %s24, 1
      %s26 = scalar_select %p23, %s24, %s25
      %p29 = pneg %p23
      %p30 = scmp.eq.s32.totalorder %s14, 3
      %p31 = por %p29, %p30
      %p32 = scmp.ne.s32.totalorder %s24, %s27
      %p33 = scmp.eq.s32.totalorder %s14, 0
      %p34 = por %p32, %p33
      %p35 = scmp.ne.s32.totalorder %s24, %s27
      %p36 = scmp.eq.s32.totalorder %s19, 3
      %p37 = por %p35, %p36
      %p38 = scmp.ne.s32.totalorder %s27, %s28
      %p39 = scmp.eq.s32.totalorder %s19, 0
      %p40 = por %p38, %p39
      %p41 = scmp.ne.s32.totalorder %s27, %s28
      %p42 = scmp.eq.s32.totalorder %s20, 3
      %p43 = por %p41, %p42
      %p45 = scmp.ne.s32.totalorder %s28, %s44
      %p46 = scmp.eq.s32.totalorder %s20, 0
      %p47 = por %p45, %p46
      %s49 = sadd.s32 %s48, 1
      %p52 = scmp.eq.s32.totalorder %s14, 3
      %p53 = scmp.ne.s32.totalorder %s48, %s50
      %p54 = scmp.eq.s32.totalorder %s14, 0
      %p55 = por %p53, %p54
      %p56 = scmp.ne.s32.totalorder %s48, %s50
      %p57 = scmp.eq.s32.totalorder %s19, 3
      %p58 = por %p56, %p57
      %p59 = scmp.ne.s32.totalorder %s50, %s51
      %p60 = scmp.eq.s32.totalorder %s19, 0
      %p61 = por %p59, %p60
      %p62 = scmp.ne.s32.totalorder %s50, %s51
      %p63 = scmp.eq.s32.totalorder %s20, 3
      %p64 = por %p62, %p63
      %p66 = scmp.ne.s32.totalorder %s51, %s65
      %p67 = scmp.eq.s32.totalorder %s20, 0
      %p68 = por %p66, %p67
      %s70 = sadd.s32 %s69, 1
      %p73 = scmp.eq.s32.totalorder %s14, 3
      %p74 = scmp.ne.s32.totalorder %s69, %s71
      %p75 = scmp.eq.s32.totalorder %s14, 0
      %p76 = por %p74, %p75
      %p77 = scmp.ne.s32.totalorder %s69, %s71
      %p78 = scmp.eq.s32.totalorder %s19, 3
      %p79 = por %p77, %p78
      %p80 = scmp.ne.s32.totalorder %s71, %s72
      %p81 = scmp.eq.s32.totalorder %s19, 0
      %p82 = por %p80, %p81
      %p83 = scmp.ne.s32.totalorder %s71, %s72
      %p84 = scmp.eq.s32.totalorder %s20, 3
      %p85 = por %p83, %p84
      %p87 = scmp.ne.s32.totalorder %s72, %s86
      %p88 = scmp.eq.s32.totalorder %s20, 0
      %p89 = por %p87, %p88
      %s91 = sadd.s32 %s90, 1
      %p94 = scmp.eq.s32.totalorder %s14, 3
      %p95 = scmp.ne.s32.totalorder %s90, %s92
      %p96 = scmp.eq.s32.totalorder %s14, 0
      %p97 = por %p95, %p96
      %p98 = scmp.ne.s32.totalorder %s90, %s92
      %p99 = scmp.eq.s32.totalorder %s19, 3
      %p100 = por %p98, %p99
      %p101 = scmp.ne.s32.totalorder %s92, %s93
      %p102 = scmp.eq.s32.totalorder %s19, 0
      %p103 = por %p101, %p102
      %p104 = scmp.ne.s32.totalorder %s92, %s93
      %p105 = scmp.eq.s32.totalorder %s20, 3
      %p106 = por %p104, %p105
      %p108 = scmp.ne.s32.totalorder %s93, %s107
      %p109 = scmp.eq.s32.totalorder %s20, 0
      %p110 = por %p108, %p109
      %s112 = sadd.s32 %s111, 1
      %p115 = scmp.eq.s32.totalorder %s14, 3
      %p116 = scmp.ne.s32.totalorder %s111, %s113
      %p117 = scmp.eq.s32.totalorder %s14, 0
      %p118 = por %p116, %p117
      %p119 = scmp.ne.s32.totalorder %s111, %s113
      %p120 = scmp.eq.s32.totalorder %s19, 3
      %p121 = por %p119, %p120
      %p122 = scmp.ne.s32.totalorder %s113, %s114
      %p123 = scmp.eq.s32.totalorder %s19, 0
      %p124 = por %p122, %p123
      %p125 = scmp.ne.s32.totalorder %s113, %s114
      %p126 = scmp.eq.s32.totalorder %s20, 3
      %p127 = por %p125, %p126
      %p129 = scmp.ne.s32.totalorder %s114, %s128
      %p130 = scmp.eq.s32.totalorder %s20, 0
      %p131 = por %p129, %p130
      %s132 = ssub.s32 %s14, %s21
      %p133 = scmp.eq.s32.totalorder %s132, 0
      %s135 = sadd.s32 %s134, 1
      %s136 = scalar_select %p133, %s134, %s135
      %p139 = pneg %p133
      %p140 = scmp.eq.s32.totalorder %s14, 3
      %p141 = por %p139, %p140
      %p142 = scmp.ne.s32.totalorder %s134, %s137
      %p143 = scmp.eq.s32.totalorder %s14, 0
      %p144 = por %p142, %p143
      %p145 = scmp.ne.s32.totalorder %s134, %s137
      %p146 = scmp.eq.s32.totalorder %s19, 3
      %p147 = por %p145, %p146
      %p148 = scmp.ne.s32.totalorder %s137, %s138
      %p149 = scmp.eq.s32.totalorder %s19, 0
      %p150 = por %p148, %p149
      %p151 = scmp.ne.s32.totalorder %s137, %s138
      %p152 = scmp.eq.s32.totalorder %s20, 3
      %p153 = por %p151, %p152
      %p155 = scmp.ne.s32.totalorder %s138, %s154
      %p156 = scmp.eq.s32.totalorder %s20, 0
      %p157 = por %p155, %p156
      %p158 = scmp.le.s32.totalorder 1, %s14
      %p159 = scmp.lt.s32.totalorder %s14, 5
      %p160 = pnand %p158, %p159
      %p161 = pneg %p160
      // Predicated region
      $region9: #{tpu_custom_call.1} parent=5 // pred_check
        _
      $region10: #{tpu_custom_call.1} parent=5 // pred_check_branch
        %163 = sbr.rel (%p160) target = $region12
      $region11: #{tpu_custom_call.1} parent=5 // pred_region
        %s164 = ssub.s32 %s14, 1
        // Predicated region
        $region13: #{tpu_custom_call.1} parent=11 // pred_check
          %p165 = pneg %p61
        $region14: #{tpu_custom_call.1} parent=11 // pred_check_branch
          %167 = sbr.rel (%p165) target = $region16
        $region15: #{tpu_custom_call.1} parent=11 // pred_region
          _
        $region16: #{tpu_custom_call.1} parent=11 // pred_fallthru
          _
        // Predicated region
        $region17: #{tpu_custom_call.1} parent=11 // pred_check
          %p168 = pneg %p82
        $region18: #{tpu_custom_call.1} parent=11 // pred_check_branch
          %170 = sbr.rel (%p168) target = $region20
        $region19: #{tpu_custom_call.1} parent=11 // pred_region
          _
        $region20: #{tpu_custom_call.1} parent=11 // pred_fallthru
          _
        // Predicated region
        $region21: #{tpu_custom_call.1} parent=11 // pred_check
          %p171 = pneg %p103
        $region22: #{tpu_custom_call.1} parent=11 // pred_check_branch
          %173 = sbr.rel (%p171) target = $region24
        $region23: #{tpu_custom_call.1} parent=11 // pred_region
          _
        $region24: #{tpu_custom_call.1} parent=11 // pred_fallthru
          _
        // Predicated region
        $region25: #{tpu_custom_call.1} parent=11 // pred_check
          %p174 = pneg %p124
        $region26: #{tpu_custom_call.1} parent=11 // pred_check_branch
          %176 = sbr.rel (%p174) target = $region28
        $region27: #{tpu_custom_call.1} parent=11 // pred_region
          _
        $region28: #{tpu_custom_call.1} parent=11 // pred_fallthru
          _
      $region12: #{tpu_custom_call.1} parent=5 // pred_fallthru
        _
      %p177 = scmp.lt.s32.totalorder %s14, 4
      // Predicated region
      $region29: #{tpu_custom_call.1} parent=5 // pred_check
        %p178 = pneg %p177
      $region30: #{tpu_custom_call.1} parent=5 // pred_check_branch
        %180 = sbr.rel (%p178) target = $region32
      $region31: #{tpu_custom_call.1} parent=5 // pred_region
        // Predicated region
        $region33: #{tpu_custom_call.1} parent=31 // pred_check
          %p181 = pneg %p34
        $region34: #{tpu_custom_call.1} parent=31 // pred_check_branch
          %183 = sbr.rel (%p181) target = $region36
        $region35: #{tpu_custom_call.1} parent=31 // pred_region
          %s184 = smul.u32 16, %s14
          %p185 = scmp.lt.s32.totalorder %s184, 63
          %s186 = scalar_select %p185, %s184, 63
          %s187 = smul.addr %s186, 8
          %s188 = smul.addr %s187, 8
          %s189 = scalar_lea.vmem %s0, %s188
          %s190 = smul.u32 16, %s14
        $region36: #{tpu_custom_call.1} parent=31 // pred_fallthru
          _
      $region32: #{tpu_custom_call.1} parent=5 // pred_fallthru
        _
      %p191 = scmp.le.s32.totalorder 1, %s14
      %p192 = scmp.lt.s32.totalorder %s14, 5
      %p193 = pnand %p191, %p192
      %p194 = pneg %p193
      // Predicated region
      $region37: #{tpu_custom_call.1} parent=5 // pred_check
        _
      $region38: #{tpu_custom_call.1} parent=5 // pred_check_branch
        %196 = sbr.rel (%p193) target = $region40
      $region39: #{tpu_custom_call.1} parent=5 // pred_region
        %s197 = ssub.s32 %s14, 1
        %s198 = smul.u32 16, %s19
        %p199 = scmp.lt.s32.totalorder %s198, 63
        %s200 = scalar_select %p199, %s198, 63
        %s201 = smul.addr %s200, 8
        %s202 = smul.addr %s201, 8
        %s203 = scalar_lea.vmem %s0, %s202
        %p204 = pneg %p40
        %p205 = pneg %p37
        %p206 = pneg %p61
        %p207 = pneg %p58
        %p208 = pneg %p82
        %p209 = pneg %p79
        %p210 = pneg %p103
        %p211 = pneg %p100
        %p212 = pneg %p124
        %p213 = pneg %p121
        %p214 = pneg %p150
        %p215 = pneg %p147
        %s216 = sand.u32 %s137, 1
        %s217 = scalar_lea.sflag [#allocation3], %s216
        %s218 = sand.u32 %s137, 1
        %s219 = smul.addr %s218, 128
        %s220 = scalar_lea.vmem [#allocation2], %s219
        %s221 = smul.u32 16, %s19
        %p222 = scmp.lt.s32.totalorder %s221, 63
        %s223 = scalar_select %p222, %s221, 63
        %s224 = smul.addr %s223, 8
        %s225 = smul.addr %s224, 8
        %s226 = scalar_lea.vmem %s0, %s225
        %s227 = smul.u32 16, %s19
        %s228 = smul.u32 16, %s19
        %v230 = vld [vmem:[%s226] sm:$0xff]
        %v231 = vld [vmem:[%s226 + $0x8] sm:$0xff]
        %v232 = vld [vmem:[%s226 + $0x10] sm:$0xff]
        %v233 = vld [vmem:[%s226 + $0x18] sm:$0xff]
        %v234 = vld [vmem:[%s226 + $0x20] sm:$0xff]
        %v235 = vld [vmem:[%s226 + $0x28] sm:$0xff]
        %v236 = vld [vmem:[%s226 + $0x30] sm:$0xff]
        %v237 = vld [vmem:[%s226 + $0x38] sm:$0xff]
        %v238 = vld [vmem:[%s226 + $0x40] sm:$0xff]
        %v239 = vld [vmem:[%s226 + $0x48] sm:$0xff]
        %v240 = vld [vmem:[%s226 + $0x50] sm:$0xff]
        %v241 = vld [vmem:[%s226 + $0x58] sm:$0xff]
        %v242 = vld [vmem:[%s226 + $0x60] sm:$0xff]
        %v243 = vld [vmem:[%s226 + $0x68] sm:$0xff]
        %v244 = vld [vmem:[%s226 + $0x70] sm:$0xff]
        %v245 = vld [vmem:[%s226 + $0x78] sm:$0xff]
        %v246 = vld [vmem:[%s226 + $0x80] sm:$0xff]
        %v247 = vld [vmem:[%s226 + $0x88] sm:$0xff]
        %v248 = vld [vmem:[%s226 + $0x90] sm:$0xff]
        %v249 = vld [vmem:[%s226 + $0x98] sm:$0xff]
        %v250 = vld [vmem:[%s226 + $0xa0] sm:$0xff]
        %v251 = vld [vmem:[%s226 + $0xa8] sm:$0xff]
        %v252 = vld [vmem:[%s226 + $0xb0] sm:$0xff]
        %v253 = vld [vmem:[%s226 + $0xb8] sm:$0xff]
        %v254 = vld [vmem:[%s226 + $0xc0] sm:$0xff]
        %v255 = vld [vmem:[%s226 + $0xc8] sm:$0xff]
        %v256 = vld [vmem:[%s226 + $0xd0] sm:$0xff]
        %v257 = vld [vmem:[%s226 + $0xd8] sm:$0xff]
        %v258 = vld [vmem:[%s226 + $0xe0] sm:$0xff]
        %v259 = vld [vmem:[%s226 + $0xe8] sm:$0xff]
        %v260 = vld [vmem:[%s226 + $0xf0] sm:$0xff]
        %v261 = vld [vmem:[%s226 + $0xf8] sm:$0xff]
        %v262 = vld [vmem:[%s226 + $0x100] sm:$0xff]
        %v263 = vld [vmem:[%s226 + $0x108] sm:$0xff]
        %v264 = vld [vmem:[%s226 + $0x110] sm:$0xff]
        %v265 = vld [vmem:[%s226 + $0x118] sm:$0xff]
        %v266 = vld [vmem:[%s226 + $0x120] sm:$0xff]
        %v267 = vld [vmem:[%s226 + $0x128] sm:$0xff]
        %v268 = vld [vmem:[%s226 + $0x130] sm:$0xff]
        %v269 = vld [vmem:[%s226 + $0x138] sm:$0xff]
        %v270 = vld [vmem:[%s226 + $0x140] sm:$0xff]
        %v271 = vld [vmem:[%s226 + $0x148] sm:$0xff]
        %v272 = vld [vmem:[%s226 + $0x150] sm:$0xff]
        %v273 = vld [vmem:[%s226 + $0x158] sm:$0xff]
        %v274 = vld [vmem:[%s226 + $0x160] sm:$0xff]
        %v275 = vld [vmem:[%s226 + $0x168] sm:$0xff]
        %v276 = vld [vmem:[%s226 + $0x170] sm:$0xff]
        %v277 = vld [vmem:[%s226 + $0x178] sm:$0xff]
        %v278 = vld [vmem:[%s226 + $0x180] sm:$0xff]
        %v279 = vld [vmem:[%s226 + $0x188] sm:$0xff]
        %v280 = vld [vmem:[%s226 + $0x190] sm:$0xff]
        %v281 = vld [vmem:[%s226 + $0x198] sm:$0xff]
        %v282 = vld [vmem:[%s226 + $0x1a0] sm:$0xff]
        %v283 = vld [vmem:[%s226 + $0x1a8] sm:$0xff]
        %v284 = vld [vmem:[%s226 + $0x1b0] sm:$0xff]
        %v285 = vld [vmem:[%s226 + $0x1b8] sm:$0xff]
        %v286 = vld [vmem:[%s226 + $0x1c0] sm:$0xff]
        %v287 = vld [vmem:[%s226 + $0x1c8] sm:$0xff]
        %v288 = vld [vmem:[%s226 + $0x1d0] sm:$0xff]
        %v289 = vld [vmem:[%s226 + $0x1d8] sm:$0xff]
        %v290 = vld [vmem:[%s226 + $0x1e0] sm:$0xff]
        %v291 = vld [vmem:[%s226 + $0x1e8] sm:$0xff]
        %v292 = vld [vmem:[%s226 + $0x1f0] sm:$0xff]
        %v293 = vld [vmem:[%s226 + $0x1f8] sm:$0xff]
        %v294 = vld [vmem:[%s226 + $0x200] sm:$0xff]
        %v295 = vld [vmem:[%s226 + $0x208] sm:$0xff]
        %v296 = vld [vmem:[%s226 + $0x210] sm:$0xff]
        %v297 = vld [vmem:[%s226 + $0x218] sm:$0xff]
        %v298 = vld [vmem:[%s226 + $0x220] sm:$0xff]
        %v299 = vld [vmem:[%s226 + $0x228] sm:$0xff]
        %v300 = vld [vmem:[%s226 + $0x230] sm:$0xff]
        %v301 = vld [vmem:[%s226 + $0x238] sm:$0xff]
        %v302 = vld [vmem:[%s226 + $0x240] sm:$0xff]
        %v303 = vld [vmem:[%s226 + $0x248] sm:$0xff]
        %v304 = vld [vmem:[%s226 + $0x250] sm:$0xff]
        %v305 = vld [vmem:[%s226 + $0x258] sm:$0xff]
        %v306 = vld [vmem:[%s226 + $0x260] sm:$0xff]
        %v307 = vld [vmem:[%s226 + $0x268] sm:$0xff]
        %v308 = vld [vmem:[%s226 + $0x270] sm:$0xff]
        %v309 = vld [vmem:[%s226 + $0x278] sm:$0xff]
        %v310 = vld [vmem:[%s226 + $0x280] sm:$0xff]
        %v311 = vld [vmem:[%s226 + $0x288] sm:$0xff]
        %v312 = vld [vmem:[%s226 + $0x290] sm:$0xff]
        %v313 = vld [vmem:[%s226 + $0x298] sm:$0xff]
        %v314 = vld [vmem:[%s226 + $0x2a0] sm:$0xff]
        %v315 = vld [vmem:[%s226 + $0x2a8] sm:$0xff]
        %v316 = vld [vmem:[%s226 + $0x2b0] sm:$0xff]
        %v317 = vld [vmem:[%s226 + $0x2b8] sm:$0xff]
        %v318 = vld [vmem:[%s226 + $0x2c0] sm:$0xff]
        %v319 = vld [vmem:[%s226 + $0x2c8] sm:$0xff]
        %v320 = vld [vmem:[%s226 + $0x2d0] sm:$0xff]
        %v321 = vld [vmem:[%s226 + $0x2d8] sm:$0xff]
        %v322 = vld [vmem:[%s226 + $0x2e0] sm:$0xff]
        %v323 = vld [vmem:[%s226 + $0x2e8] sm:$0xff]
        %v324 = vld [vmem:[%s226 + $0x2f0] sm:$0xff]
        %v325 = vld [vmem:[%s226 + $0x2f8] sm:$0xff]
        %v326 = vld [vmem:[%s226 + $0x300] sm:$0xff]
        %v327 = vld [vmem:[%s226 + $0x308] sm:$0xff]
        %v328 = vld [vmem:[%s226 + $0x310] sm:$0xff]
        %v329 = vld [vmem:[%s226 + $0x318] sm:$0xff]
        %v330 = vld [vmem:[%s226 + $0x320] sm:$0xff]
        %v331 = vld [vmem:[%s226 + $0x328] sm:$0xff]
        %v332 = vld [vmem:[%s226 + $0x330] sm:$0xff]
        %v333 = vld [vmem:[%s226 + $0x338] sm:$0xff]
        %v334 = vld [vmem:[%s226 + $0x340] sm:$0xff]
        %v335 = vld [vmem:[%s226 + $0x348] sm:$0xff]
        %v336 = vld [vmem:[%s226 + $0x350] sm:$0xff]
        %v337 = vld [vmem:[%s226 + $0x358] sm:$0xff]
        %v338 = vld [vmem:[%s226 + $0x360] sm:$0xff]
        %v339 = vld [vmem:[%s226 + $0x368] sm:$0xff]
        %v340 = vld [vmem:[%s226 + $0x370] sm:$0xff]
        %v341 = vld [vmem:[%s226 + $0x378] sm:$0xff]
        %v342 = vld [vmem:[%s226 + $0x380] sm:$0xff]
        %v343 = vld [vmem:[%s226 + $0x388] sm:$0xff]
        %v344 = vld [vmem:[%s226 + $0x390] sm:$0xff]
        %v345 = vld [vmem:[%s226 + $0x398] sm:$0xff]
        %v346 = vld [vmem:[%s226 + $0x3a0] sm:$0xff]
        %v347 = vld [vmem:[%s226 + $0x3a8] sm:$0xff]
        %v348 = vld [vmem:[%s226 + $0x3b0] sm:$0xff]
        %v349 = vld [vmem:[%s226 + $0x3b8] sm:$0xff]
        %v350 = vld [vmem:[%s226 + $0x3c0] sm:$0xff]
        %v351 = vld [vmem:[%s226 + $0x3c8] sm:$0xff]
        %v352 = vld [vmem:[%s226 + $0x3d0] sm:$0xff]
        %v353 = vld [vmem:[%s226 + $0x3d8] sm:$0xff]
        %v354 = vld [vmem:[%s226 + $0x3e0] sm:$0xff]
        %v355 = vld [vmem:[%s226 + $0x3e8] sm:$0xff]
        %v356 = vld [vmem:[%s226 + $0x3f0] sm:$0xff]
        %v357 = vld [vmem:[%s226 + $0x3f8] sm:$0xff]
        %v358 = vpack.c.bf16 %v238, %v230
        %v359 = vpack.c.bf16 %v239, %v231
        %v360 = vpack.c.bf16 %v240, %v232
        %v361 = vpack.c.bf16 %v241, %v233
        %v362 = vpack.c.bf16 %v242, %v234
        %v363 = vpack.c.bf16 %v243, %v235
        %v364 = vpack.c.bf16 %v244, %v236
        %v365 = vpack.c.bf16 %v245, %v237
        %v366 = vpack.c.bf16 %v254, %v246
        %v367 = vpack.c.bf16 %v255, %v247
        %v368 = vpack.c.bf16 %v256, %v248
        %v369 = vpack.c.bf16 %v257, %v249
        %v370 = vpack.c.bf16 %v258, %v250
        %v371 = vpack.c.bf16 %v259, %v251
        %v372 = vpack.c.bf16 %v260, %v252
        %v373 = vpack.c.bf16 %v261, %v253
        %v374 = vpack.c.bf16 %v270, %v262
        %v375 = vpack.c.bf16 %v271, %v263
        %v376 = vpack.c.bf16 %v272, %v264
        %v377 = vpack.c.bf16 %v273, %v265
        %v378 = vpack.c.bf16 %v274, %v266
        %v379 = vpack.c.bf16 %v275, %v267
        %v380 = vpack.c.bf16 %v276, %v268
        %v381 = vpack.c.bf16 %v277, %v269
        %v382 = vpack.c.bf16 %v286, %v278
        %v383 = vpack.c.bf16 %v287, %v279
        %v384 = vpack.c.bf16 %v288, %v280
        %v385 = vpack.c.bf16 %v289, %v281
        %v386 = vpack.c.bf16 %v290, %v282
        %v387 = vpack.c.bf16 %v291, %v283
        %v388 = vpack.c.bf16 %v292, %v284
        %v389 = vpack.c.bf16 %v293, %v285
        %v390 = vpack.c.bf16 %v302, %v294
        %v391 = vpack.c.bf16 %v303, %v295
        %v392 = vpack.c.bf16 %v304, %v296
        %v393 = vpack.c.bf16 %v305, %v297
        %v394 = vpack.c.bf16 %v306, %v298
        %v395 = vpack.c.bf16 %v307, %v299
        %v396 = vpack.c.bf16 %v308, %v300
        %v397 = vpack.c.bf16 %v309, %v301
        %v398 = vpack.c.bf16 %v318, %v310
        %v399 = vpack.c.bf16 %v319, %v311
        %v400 = vpack.c.bf16 %v320, %v312
        %v401 = vpack.c.bf16 %v321, %v313
        %v402 = vpack.c.bf16 %v322, %v314
        %v403 = vpack.c.bf16 %v323, %v315
        %v404 = vpack.c.bf16 %v324, %v316
        %v405 = vpack.c.bf16 %v325, %v317
        %v406 = vpack.c.bf16 %v334, %v326
        %v407 = vpack.c.bf16 %v335, %v327
        %v408 = vpack.c.bf16 %v336, %v328
        %v409 = vpack.c.bf16 %v337, %v329
        %v410 = vpack.c.bf16 %v338, %v330
        %v411 = vpack.c.bf16 %v339, %v331
        %v412 = vpack.c.bf16 %v340, %v332
        %v413 = vpack.c.bf16 %v341, %v333
        %v414 = vpack.c.bf16 %v350, %v342
        %v415 = vpack.c.bf16 %v351, %v343
        %v416 = vpack.c.bf16 %v352, %v344
        %v417 = vpack.c.bf16 %v353, %v345
        %v418 = vpack.c.bf16 %v354, %v346
        %v419 = vpack.c.bf16 %v355, %v347
        %v420 = vpack.c.bf16 %v356, %v348
        %v421 = vpack.c.bf16 %v357, %v349
        %v422 = vld [vmem:[%s1] sm:$0xff]
        %v423 = vld [vmem:[%s1 + $0x8] sm:$0xff]
        %v424 = vld [vmem:[%s1 + $0x10] sm:$0xff]
        %v425 = vld [vmem:[%s1 + $0x18] sm:$0xff]
        %v426 = vld [vmem:[%s1 + $0x20] sm:$0xff]
        %v427 = vld [vmem:[%s1 + $0x28] sm:$0xff]
        %v428 = vld [vmem:[%s1 + $0x30] sm:$0xff]
        %v429 = vld [vmem:[%s1 + $0x38] sm:$0xff]
        %v430 = vld [vmem:[%s1 + $0x40] sm:$0xff]
        %v431 = vld [vmem:[%s1 + $0x48] sm:$0xff]
        %v432 = vld [vmem:[%s1 + $0x50] sm:$0xff]
        %v433 = vld [vmem:[%s1 + $0x58] sm:$0xff]
        %v434 = vld [vmem:[%s1 + $0x60] sm:$0xff]
        %v435 = vld [vmem:[%s1 + $0x68] sm:$0xff]
        %v436 = vld [vmem:[%s1 + $0x70] sm:$0xff]
        %v437 = vld [vmem:[%s1 + $0x78] sm:$0xff]
        %v438 = vld [vmem:[%s1 + $0x80] sm:$0xff]
        %v439 = vld [vmem:[%s1 + $0x88] sm:$0xff]
        %v440 = vld [vmem:[%s1 + $0x90] sm:$0xff]
        %v441 = vld [vmem:[%s1 + $0x98] sm:$0xff]
        %v442 = vld [vmem:[%s1 + $0xa0] sm:$0xff]
        %v443 = vld [vmem:[%s1 + $0xa8] sm:$0xff]
        %v444 = vld [vmem:[%s1 + $0xb0] sm:$0xff]
        %v445 = vld [vmem:[%s1 + $0xb8] sm:$0xff]
        %v446 = vld [vmem:[%s1 + $0xc0] sm:$0xff]
        %v447 = vld [vmem:[%s1 + $0xc8] sm:$0xff]
        %v448 = vld [vmem:[%s1 + $0xd0] sm:$0xff]
        %v449 = vld [vmem:[%s1 + $0xd8] sm:$0xff]
        %v450 = vld [vmem:[%s1 + $0xe0] sm:$0xff]
        %v451 = vld [vmem:[%s1 + $0xe8] sm:$0xff]
        %v452 = vld [vmem:[%s1 + $0xf0] sm:$0xff]
        %v453 = vld [vmem:[%s1 + $0xf8] sm:$0xff]
        %v454 = vld [vmem:[%s1 + $0x100] sm:$0xff]
        %v455 = vld [vmem:[%s1 + $0x108] sm:$0xff]
        %v456 = vld [vmem:[%s1 + $0x110] sm:$0xff]
        %v457 = vld [vmem:[%s1 + $0x118] sm:$0xff]
        %v458 = vld [vmem:[%s1 + $0x120] sm:$0xff]
        %v459 = vld [vmem:[%s1 + $0x128] sm:$0xff]
        %v460 = vld [vmem:[%s1 + $0x130] sm:$0xff]
        %v461 = vld [vmem:[%s1 + $0x138] sm:$0xff]
        %v462 = vld [vmem:[%s1 + $0x140] sm:$0xff]
        %v463 = vld [vmem:[%s1 + $0x148] sm:$0xff]
        %v464 = vld [vmem:[%s1 + $0x150] sm:$0xff]
        %v465 = vld [vmem:[%s1 + $0x158] sm:$0xff]
        %v466 = vld [vmem:[%s1 + $0x160] sm:$0xff]
        %v467 = vld [vmem:[%s1 + $0x168] sm:$0xff]
        %v468 = vld [vmem:[%s1 + $0x170] sm:$0xff]
        %v469 = vld [vmem:[%s1 + $0x178] sm:$0xff]
        %v470 = vld [vmem:[%s1 + $0x180] sm:$0xff]
        %v471 = vld [vmem:[%s1 + $0x188] sm:$0xff]
        %v472 = vld [vmem:[%s1 + $0x190] sm:$0xff]
        %v473 = vld [vmem:[%s1 + $0x198] sm:$0xff]
        %v474 = vld [vmem:[%s1 + $0x1a0] sm:$0xff]
        %v475 = vld [vmem:[%s1 + $0x1a8] sm:$0xff]
        %v476 = vld [vmem:[%s1 + $0x1b0] sm:$0xff]
        %v477 = vld [vmem:[%s1 + $0x1b8] sm:$0xff]
        %v478 = vld [vmem:[%s1 + $0x1c0] sm:$0xff]
        %v479 = vld [vmem:[%s1 + $0x1c8] sm:$0xff]
        %v480 = vld [vmem:[%s1 + $0x1d0] sm:$0xff]
        %v481 = vld [vmem:[%s1 + $0x1d8] sm:$0xff]
        %v482 = vld [vmem:[%s1 + $0x1e0] sm:$0xff]
        %v483 = vld [vmem:[%s1 + $0x1e8] sm:$0xff]
        %v484 = vld [vmem:[%s1 + $0x1f0] sm:$0xff]
        %v485 = vld [vmem:[%s1 + $0x1f8] sm:$0xff]
        %v486 = vld [vmem:[%s1 + $0x200] sm:$0xff]
        %v487 = vld [vmem:[%s1 + $0x208] sm:$0xff]
        %v488 = vld [vmem:[%s1 + $0x210] sm:$0xff]
        %v489 = vld [vmem:[%s1 + $0x218] sm:$0xff]
        %v490 = vld [vmem:[%s1 + $0x220] sm:$0xff]
        %v491 = vld [vmem:[%s1 + $0x228] sm:$0xff]
        %v492 = vld [vmem:[%s1 + $0x230] sm:$0xff]
        %v493 = vld [vmem:[%s1 + $0x238] sm:$0xff]
        %v494 = vld [vmem:[%s1 + $0x240] sm:$0xff]
        %v495 = vld [vmem:[%s1 + $0x248] sm:$0xff]
        %v496 = vld [vmem:[%s1 + $0x250] sm:$0xff]
        %v497 = vld [vmem:[%s1 + $0x258] sm:$0xff]
        %v498 = vld [vmem:[%s1 + $0x260] sm:$0xff]
        %v499 = vld [vmem:[%s1 + $0x268] sm:$0xff]
        %v500 = vld [vmem:[%s1 + $0x270] sm:$0xff]
        %v501 = vld [vmem:[%s1 + $0x278] sm:$0xff]
        %v502 = vld [vmem:[%s1 + $0x280] sm:$0xff]
        %v503 = vld [vmem:[%s1 + $0x288] sm:$0xff]
        %v504 = vld [vmem:[%s1 + $0x290] sm:$0xff]
        %v505 = vld [vmem:[%s1 + $0x298] sm:$0xff]
        %v506 = vld [vmem:[%s1 + $0x2a0] sm:$0xff]
        %v507 = vld [vmem:[%s1 + $0x2a8] sm:$0xff]
        %v508 = vld [vmem:[%s1 + $0x2b0] sm:$0xff]
        %v509 = vld [vmem:[%s1 + $0x2b8] sm:$0xff]
        %v510 = vld [vmem:[%s1 + $0x2c0] sm:$0xff]
        %v511 = vld [vmem:[%s1 + $0x2c8] sm:$0xff]
        %v512 = vld [vmem:[%s1 + $0x2d0] sm:$0xff]
        %v513 = vld [vmem:[%s1 + $0x2d8] sm:$0xff]
        %v514 = vld [vmem:[%s1 + $0x2e0] sm:$0xff]
        %v515 = vld [vmem:[%s1 + $0x2e8] sm:$0xff]
        %v516 = vld [vmem:[%s1 + $0x2f0] sm:$0xff]
        %v517 = vld [vmem:[%s1 + $0x2f8] sm:$0xff]
        %v518 = vld [vmem:[%s1 + $0x300] sm:$0xff]
        %v519 = vld [vmem:[%s1 + $0x308] sm:$0xff]
        %v520 = vld [vmem:[%s1 + $0x310] sm:$0xff]
        %v521 = vld [vmem:[%s1 + $0x318] sm:$0xff]
        %v522 = vld [vmem:[%s1 + $0x320] sm:$0xff]
        %v523 = vld [vmem:[%s1 + $0x328] sm:$0xff]
        %v524 = vld [vmem:[%s1 + $0x330] sm:$0xff]
        %v525 = vld [vmem:[%s1 + $0x338] sm:$0xff]
        %v526 = vld [vmem:[%s1 + $0x340] sm:$0xff]
        %v527 = vld [vmem:[%s1 + $0x348] sm:$0xff]
        %v528 = vld [vmem:[%s1 + $0x350] sm:$0xff]
        %v529 = vld [vmem:[%s1 + $0x358] sm:$0xff]
        %v530 = vld [vmem:[%s1 + $0x360] sm:$0xff]
        %v531 = vld [vmem:[%s1 + $0x368] sm:$0xff]
        %v532 = vld [vmem:[%s1 + $0x370] sm:$0xff]
        %v533 = vld [vmem:[%s1 + $0x378] sm:$0xff]
        %v534 = vld [vmem:[%s1 + $0x380] sm:$0xff]
        %v535 = vld [vmem:[%s1 + $0x388] sm:$0xff]
        %v536 = vld [vmem:[%s1 + $0x390] sm:$0xff]
        %v537 = vld [vmem:[%s1 + $0x398] sm:$0xff]
        %v538 = vld [vmem:[%s1 + $0x3a0] sm:$0xff]
        %v539 = vld [vmem:[%s1 + $0x3a8] sm:$0xff]
        %v540 = vld [vmem:[%s1 + $0x3b0] sm:$0xff]
        %v541 = vld [vmem:[%s1 + $0x3b8] sm:$0xff]
        %v542 = vld [vmem:[%s1 + $0x3c0] sm:$0xff]
        %v543 = vld [vmem:[%s1 + $0x3c8] sm:$0xff]
        %v544 = vld [vmem:[%s1 + $0x3d0] sm:$0xff]
        %v545 = vld [vmem:[%s1 + $0x3d8] sm:$0xff]
        %v546 = vld [vmem:[%s1 + $0x3e0] sm:$0xff]
        %v547 = vld [vmem:[%s2] sm:$0x3]
        %v549 = vlaneseq
        %v550 = vshrl.u32 %v549, 7
        %v551 = vsub.s32 0, %v550
        %v552 = vrot.slane %v547, %v551
        %v553 = vlaneseq
        %v554 = vshrl.u32 %v553, 7
        %v555 = vsub.s32 1, %v554
        %v556 = vrot.slane %v547, %v555
        %v684 = vunpack.c.l.b16 %v422
        %v685 = vunpack.c.h.b16 %v422
        %v686 = vunpack.c.l.b16 %v423
        %v687 = vunpack.c.h.b16 %v423
        %v688 = vunpack.c.l.b16 %v424
        %v689 = vunpack.c.h.b16 %v424
        %v690 = vunpack.c.l.b16 %v425
        %v691 = vunpack.c.h.b16 %v425
        %v692 = vunpack.c.l.b16 %v426
        %v693 = vunpack.c.h.b16 %v426
        %v694 = vunpack.c.l.b16 %v427
        %v695 = vunpack.c.h.b16 %v427
        %v696 = vunpack.c.l.b16 %v428
        %v697 = vunpack.c.h.b16 %v428
        %v698 = vunpack.c.l.b16 %v429
        %v699 = vunpack.c.h.b16 %v429
        %v700 = vunpack.c.l.b16 %v430
        %v701 = vunpack.c.h.b16 %v430
        %v702 = vunpack.c.l.b16 %v431
        %v703 = vunpack.c.h.b16 %v431
        %v704 = vunpack.c.l.b16 %v432
        %v705 = vunpack.c.h.b16 %v432
        %v706 = vunpack.c.l.b16 %v433
        %v707 = vunpack.c.h.b16 %v433
        %v708 = vunpack.c.l.b16 %v434
        %v709 = vunpack.c.h.b16 %v434
        %v710 = vunpack.c.l.b16 %v435
        %v711 = vunpack.c.h.b16 %v435
        %v712 = vunpack.c.l.b16 %v436
        %v713 = vunpack.c.h.b16 %v436
        %v714 = vunpack.c.l.b16 %v437
        %v715 = vunpack.c.h.b16 %v437
        %v716 = vunpack.c.l.b16 %v438
        %v717 = vunpack.c.h.b16 %v438
        %v718 = vunpack.c.l.b16 %v439
        %v719 = vunpack.c.h.b16 %v439
        %v720 = vunpack.c.l.b16 %v440
        %v721 = vunpack.c.h.b16 %v440
        %v722 = vunpack.c.l.b16 %v441
        %v723 = vunpack.c.h.b16 %v441
        %v724 = vunpack.c.l.b16 %v442
        %v725 = vunpack.c.h.b16 %v442
        %v726 = vunpack.c.l.b16 %v443
        %v727 = vunpack.c.h.b16 %v443
        %v728 = vunpack.c.l.b16 %v444
        %v729 = vunpack.c.h.b16 %v444
        %v730 = vunpack.c.l.b16 %v445
        %v731 = vunpack.c.h.b16 %v445
        %v732 = vunpack.c.l.b16 %v446
        %v733 = vunpack.c.h.b16 %v446
        %v734 = vunpack.c.l.b16 %v447
        %v735 = vunpack.c.h.b16 %v447
        %v736 = vunpack.c.l.b16 %v448
        %v737 = vunpack.c.h.b16 %v448
        %v738 = vunpack.c.l.b16 %v449
        %v739 = vunpack.c.h.b16 %v449
        %v740 = vunpack.c.l.b16 %v450
        %v741 = vunpack.c.h.b16 %v450
        %v742 = vunpack.c.l.b16 %v451
        %v743 = vunpack.c.h.b16 %v451
        %v744 = vunpack.c.l.b16 %v452
        %v745 = vunpack.c.h.b16 %v452
        %v746 = vunpack.c.l.b16 %v453
        %v747 = vunpack.c.h.b16 %v453
        %v748 = vunpack.c.l.b16 %v454
        %v749 = vunpack.c.h.b16 %v454
        %v750 = vunpack.c.l.b16 %v455
        %v751 = vunpack.c.h.b16 %v455
        %v752 = vunpack.c.l.b16 %v456
        %v753 = vunpack.c.h.b16 %v456
        %v754 = vunpack.c.l.b16 %v457
        %v755 = vunpack.c.h.b16 %v457
        %v756 = vunpack.c.l.b16 %v458
        %v757 = vunpack.c.h.b16 %v458
        %v758 = vunpack.c.l.b16 %v459
        %v759 = vunpack.c.h.b16 %v459
        %v760 = vunpack.c.l.b16 %v460
        %v761 = vunpack.c.h.b16 %v460
        %v762 = vunpack.c.l.b16 %v461
        %v763 = vunpack.c.h.b16 %v461
        %v764 = vunpack.c.l.b16 %v462
        %v765 = vunpack.c.h.b16 %v462
        %v766 = vunpack.c.l.b16 %v463
        %v767 = vunpack.c.h.b16 %v463
        %v768 = vunpack.c.l.b16 %v464
        %v769 = vunpack.c.h.b16 %v464
        %v770 = vunpack.c.l.b16 %v465
        %v771 = vunpack.c.h.b16 %v465
        %v772 = vunpack.c.l.b16 %v466
        %v773 = vunpack.c.h.b16 %v466
        %v774 = vunpack.c.l.b16 %v467
        %v775 = vunpack.c.h.b16 %v467
        %v776 = vunpack.c.l.b16 %v468
        %v777 = vunpack.c.h.b16 %v468
        %v778 = vunpack.c.l.b16 %v469
        %v779 = vunpack.c.h.b16 %v469
        %v780 = vunpack.c.l.b16 %v470
        %v781 = vunpack.c.h.b16 %v470
        %v782 = vunpack.c.l.b16 %v471
        %v783 = vunpack.c.h.b16 %v471
        %v784 = vunpack.c.l.b16 %v472
        %v785 = vunpack.c.h.b16 %v472
        %v786 = vunpack.c.l.b16 %v473
        %v787 = vunpack.c.h.b16 %v473
        %v788 = vunpack.c.l.b16 %v474
        %v789 = vunpack.c.h.b16 %v474
        %v790 = vunpack.c.l.b16 %v475
        %v791 = vunpack.c.h.b16 %v475
        %v792 = vunpack.c.l.b16 %v476
        %v793 = vunpack.c.h.b16 %v476
        %v794 = vunpack.c.l.b16 %v477
        %v795 = vunpack.c.h.b16 %v477
        %v796 = vunpack.c.l.b16 %v478
        %v797 = vunpack.c.h.b16 %v478
        %v798 = vunpack.c.l.b16 %v479
        %v799 = vunpack.c.h.b16 %v479
        %v800 = vunpack.c.l.b16 %v480
        %v801 = vunpack.c.h.b16 %v480
        %v802 = vunpack.c.l.b16 %v481
        %v803 = vunpack.c.h.b16 %v481
        %v804 = vunpack.c.l.b16 %v482
        %v805 = vunpack.c.h.b16 %v482
        %v806 = vunpack.c.l.b16 %v483
        %v807 = vunpack.c.h.b16 %v483
        %v808 = vunpack.c.l.b16 %v484
        %v809 = vunpack.c.h.b16 %v484
        %v810 = vunpack.c.l.b16 %v485
        %v811 = vunpack.c.h.b16 %v485
        %v812 = vunpack.c.l.b16 %v486
        %v813 = vunpack.c.h.b16 %v486
        %v814 = vunpack.c.l.b16 %v487
        %v815 = vunpack.c.h.b16 %v487
        %v816 = vunpack.c.l.b16 %v488
        %v817 = vunpack.c.h.b16 %v488
        %v818 = vunpack.c.l.b16 %v489
        %v819 = vunpack.c.h.b16 %v489
        %v820 = vunpack.c.l.b16 %v490
        %v821 = vunpack.c.h.b16 %v490
        %v822 = vunpack.c.l.b16 %v491
        %v823 = vunpack.c.h.b16 %v491
        %v824 = vunpack.c.l.b16 %v492
        %v825 = vunpack.c.h.b16 %v492
        %v826 = vunpack.c.l.b16 %v493
        %v827 = vunpack.c.h.b16 %v493
        %v828 = vunpack.c.l.b16 %v494
        %v829 = vunpack.c.h.b16 %v494
        %v830 = vunpack.c.l.b16 %v495
        %v831 = vunpack.c.h.b16 %v495
        %v832 = vunpack.c.l.b16 %v496
        %v833 = vunpack.c.h.b16 %v496
        %v834 = vunpack.c.l.b16 %v497
        %v835 = vunpack.c.h.b16 %v497
        %v836 = vunpack.c.l.b16 %v498
        %v837 = vunpack.c.h.b16 %v498
        %v838 = vunpack.c.l.b16 %v499
        %v839 = vunpack.c.h.b16 %v499
        %v840 = vunpack.c.l.b16 %v500
        %v841 = vunpack.c.h.b16 %v500
        %v842 = vunpack.c.l.b16 %v501
        %v843 = vunpack.c.h.b16 %v501
        %v844 = vunpack.c.l.b16 %v502
        %v845 = vunpack.c.h.b16 %v502
        %v846 = vunpack.c.l.b16 %v503
        %v847 = vunpack.c.h.b16 %v503
        %v848 = vunpack.c.l.b16 %v504
        %v849 = vunpack.c.h.b16 %v504
        %v850 = vunpack.c.l.b16 %v505
        %v851 = vunpack.c.h.b16 %v505
        %v852 = vunpack.c.l.b16 %v506
        %v853 = vunpack.c.h.b16 %v506
        %v854 = vunpack.c.l.b16 %v507
        %v855 = vunpack.c.h.b16 %v507
        %v856 = vunpack.c.l.b16 %v508
        %v857 = vunpack.c.h.b16 %v508
        %v858 = vunpack.c.l.b16 %v509
        %v859 = vunpack.c.h.b16 %v509
        %v860 = vunpack.c.l.b16 %v510
        %v861 = vunpack.c.h.b16 %v510
        %v862 = vunpack.c.l.b16 %v511
        %v863 = vunpack.c.h.b16 %v511
        %v864 = vunpack.c.l.b16 %v512
        %v865 = vunpack.c.h.b16 %v512
        %v866 = vunpack.c.l.b16 %v513
        %v867 = vunpack.c.h.b16 %v513
        %v868 = vunpack.c.l.b16 %v514
        %v869 = vunpack.c.h.b16 %v514
        %v870 = vunpack.c.l.b16 %v515
        %v871 = vunpack.c.h.b16 %v515
        %v872 = vunpack.c.l.b16 %v516
        %v873 = vunpack.c.h.b16 %v516
        %v874 = vunpack.c.l.b16 %v517
        %v875 = vunpack.c.h.b16 %v517
        %v876 = vunpack.c.l.b16 %v518
        %v877 = vunpack.c.h.b16 %v518
        %v878 = vunpack.c.l.b16 %v519
        %v879 = vunpack.c.h.b16 %v519
        %v880 = vunpack.c.l.b16 %v520
        %v881 = vunpack.c.h.b16 %v520
        %v882 = vunpack.c.l.b16 %v521
        %v883 = vunpack.c.h.b16 %v521
        %v884 = vunpack.c.l.b16 %v522
        %v885 = vunpack.c.h.b16 %v522
        %v886 = vunpack.c.l.b16 %v523
        %v887 = vunpack.c.h.b16 %v523
        %v888 = vunpack.c.l.b16 %v524
        %v889 = vunpack.c.h.b16 %v524
        %v890 = vunpack.c.l.b16 %v525
        %v891 = vunpack.c.h.b16 %v525
        %v892 = vunpack.c.l.b16 %v526
        %v893 = vunpack.c.h.b16 %v526
        %v894 = vunpack.c.l.b16 %v527
        %v895 = vunpack.c.h.b16 %v527
        %v896 = vunpack.c.l.b16 %v528
        %v897 = vunpack.c.h.b16 %v528
        %v898 = vunpack.c.l.b16 %v529
        %v899 = vunpack.c.h.b16 %v529
        %v900 = vunpack.c.l.b16 %v530
        %v901 = vunpack.c.h.b16 %v530
        %v902 = vunpack.c.l.b16 %v531
        %v903 = vunpack.c.h.b16 %v531
        %v904 = vunpack.c.l.b16 %v532
        %v905 = vunpack.c.h.b16 %v532
        %v906 = vunpack.c.l.b16 %v533
        %v907 = vunpack.c.h.b16 %v533
        %v908 = vunpack.c.l.b16 %v534
        %v909 = vunpack.c.h.b16 %v534
        %v910 = vunpack.c.l.b16 %v535
        %v911 = vunpack.c.h.b16 %v535
        %v912 = vunpack.c.l.b16 %v536
        %v913 = vunpack.c.h.b16 %v536
        %v914 = vunpack.c.l.b16 %v537
        %v915 = vunpack.c.h.b16 %v537
        %v916 = vunpack.c.l.b16 %v538
        %v917 = vunpack.c.h.b16 %v538
        %v918 = vunpack.c.l.b16 %v539
        %v919 = vunpack.c.h.b16 %v539
        %v920 = vunpack.c.l.b16 %v540
        %v921 = vunpack.c.h.b16 %v540
        %v922 = vunpack.c.l.b16 %v541
        %v923 = vunpack.c.h.b16 %v541
        %v924 = vunpack.c.l.b16 %v542
        %v925 = vunpack.c.h.b16 %v542
        %v926 = vunpack.c.l.b16 %v543
        %v927 = vunpack.c.h.b16 %v543
        %v928 = vunpack.c.l.b16 %v544
        %v929 = vunpack.c.h.b16 %v544
        %v930 = vunpack.c.l.b16 %v545
        %v931 = vunpack.c.h.b16 %v545
        %v932 = vunpack.c.l.b16 %v546
        %v933 = vunpack.c.h.b16 %v546
        %v934 = vpack.c.b16 %v686, %v684
        %v935 = vpack.c.b16 %v687, %v685
        %v936 = vpack.c.b16 %v690, %v688
        %v937 = vpack.c.b16 %v691, %v689
        %v938 = vpack.c.b16 %v694, %v692
        %v939 = vpack.c.b16 %v695, %v693
        %v940 = vpack.c.b16 %v698, %v696
        %v941 = vpack.c.b16 %v699, %v697
        %v942 = vpack.c.b16 %v702, %v700
        %v943 = vpack.c.b16 %v703, %v701
        %v944 = vpack.c.b16 %v706, %v704
        %v945 = vpack.c.b16 %v707, %v705
        %v946 = vpack.c.b16 %v710, %v708
        %v947 = vpack.c.b16 %v711, %v709
        %v948 = vpack.c.b16 %v714, %v712
        %v949 = vpack.c.b16 %v715, %v713
        %v950 = vpack.c.b16 %v718, %v716
        %v951 = vpack.c.b16 %v719, %v717
        %v952 = vpack.c.b16 %v722, %v720
        %v953 = vpack.c.b16 %v723, %v721
        %v954 = vpack.c.b16 %v726, %v724
        %v955 = vpack.c.b16 %v727, %v725
        %v956 = vpack.c.b16 %v730, %v728
        %v957 = vpack.c.b16 %v731, %v729
        %v958 = vpack.c.b16 %v734, %v732
        %v959 = vpack.c.b16 %v735, %v733
        %v960 = vpack.c.b16 %v738, %v736
        %v961 = vpack.c.b16 %v739, %v737
        %v962 = vpack.c.b16 %v742, %v740
        %v963 = vpack.c.b16 %v743, %v741
        %v964 = vpack.c.b16 %v746, %v744
        %v965 = vpack.c.b16 %v747, %v745
        %v966 = vpack.c.b16 %v750, %v748
        %v967 = vpack.c.b16 %v751, %v749
        %v968 = vpack.c.b16 %v754, %v752
        %v969 = vpack.c.b16 %v755, %v753
        %v970 = vpack.c.b16 %v758, %v756
        %v971 = vpack.c.b16 %v759, %v757
        %v972 = vpack.c.b16 %v762, %v760
        %v973 = vpack.c.b16 %v763, %v761
        %v974 = vpack.c.b16 %v766, %v764
        %v975 = vpack.c.b16 %v767, %v765
        %v976 = vpack.c.b16 %v770, %v768
        %v977 = vpack.c.b16 %v771, %v769
        %v978 = vpack.c.b16 %v774, %v772
        %v979 = vpack.c.b16 %v775, %v773
        %v980 = vpack.c.b16 %v778, %v776
        %v981 = vpack.c.b16 %v779, %v777
        %v982 = vpack.c.b16 %v782, %v780
        %v983 = vpack.c.b16 %v783, %v781
        %v984 = vpack.c.b16 %v786, %v784
        %v985 = vpack.c.b16 %v787, %v785
        %v986 = vpack.c.b16 %v790, %v788
        %v987 = vpack.c.b16 %v791, %v789
        %v988 = vpack.c.b16 %v794, %v792
        %v989 = vpack.c.b16 %v795, %v793
        %v990 = vpack.c.b16 %v798, %v796
        %v991 = vpack.c.b16 %v799, %v797
        %v992 = vpack.c.b16 %v802, %v800
        %v993 = vpack.c.b16 %v803, %v801
        %v994 = vpack.c.b16 %v806, %v804
        %v995 = vpack.c.b16 %v807, %v805
        %v996 = vpack.c.b16 %v810, %v808
        %v997 = vpack.c.b16 %v811, %v809
        %v998 = vpack.c.b16 %v814, %v812
        %v999 = vpack.c.b16 %v815, %v813
        %v1000 = vpack.c.b16 %v818, %v816
        %v1001 = vpack.c.b16 %v819, %v817
        %v1002 = vpack.c.b16 %v822, %v820
        %v1003 = vpack.c.b16 %v823, %v821
        %v1004 = vpack.c.b16 %v826, %v824
        %v1005 = vpack.c.b16 %v827, %v825
        %v1006 = vpack.c.b16 %v830, %v828
        %v1007 = vpack.c.b16 %v831, %v829
        %v1008 = vpack.c.b16 %v834, %v832
        %v1009 = vpack.c.b16 %v835, %v833
        %v1010 = vpack.c.b16 %v838, %v836
        %v1011 = vpack.c.b16 %v839, %v837
        %v1012 = vpack.c.b16 %v842, %v840
        %v1013 = vpack.c.b16 %v843, %v841
        %v1014 = vpack.c.b16 %v846, %v844
        %v1015 = vpack.c.b16 %v847, %v845
        %v1016 = vpack.c.b16 %v850, %v848
        %v1017 = vpack.c.b16 %v851, %v849
        %v1018 = vpack.c.b16 %v854, %v852
        %v1019 = vpack.c.b16 %v855, %v853
        %v1020 = vpack.c.b16 %v858, %v856
        %v1021 = vpack.c.b16 %v859, %v857
        %v1022 = vpack.c.b16 %v862, %v860
        %v1023 = vpack.c.b16 %v863, %v861
        %v1024 = vpack.c.b16 %v866, %v864
        %v1025 = vpack.c.b16 %v867, %v865
        %v1026 = vpack.c.b16 %v870, %v868
        %v1027 = vpack.c.b16 %v871, %v869
        %v1028 = vpack.c.b16 %v874, %v872
        %v1029 = vpack.c.b16 %v875, %v873
        %v1030 = vpack.c.b16 %v878, %v876
        %v1031 = vpack.c.b16 %v879, %v877
        %v1032 = vpack.c.b16 %v882, %v880
        %v1033 = vpack.c.b16 %v883, %v881
        %v1034 = vpack.c.b16 %v886, %v884
        %v1035 = vpack.c.b16 %v887, %v885
        %v1036 = vpack.c.b16 %v890, %v888
        %v1037 = vpack.c.b16 %v891, %v889
        %v1038 = vpack.c.b16 %v894, %v892
        %v1039 = vpack.c.b16 %v895, %v893
        %v1040 = vpack.c.b16 %v898, %v896
        %v1041 = vpack.c.b16 %v899, %v897
        %v1042 = vpack.c.b16 %v902, %v900
        %v1043 = vpack.c.b16 %v903, %v901
        %v1044 = vpack.c.b16 %v906, %v904
        %v1045 = vpack.c.b16 %v907, %v905
        %v1046 = vpack.c.b16 %v910, %v908
        %v1047 = vpack.c.b16 %v911, %v909
        %v1048 = vpack.c.b16 %v914, %v912
        %v1049 = vpack.c.b16 %v915, %v913
        %v1050 = vpack.c.b16 %v918, %v916
        %v1051 = vpack.c.b16 %v919, %v917
        %v1052 = vpack.c.b16 %v922, %v920
        %v1053 = vpack.c.b16 %v923, %v921
        %v1054 = vpack.c.b16 %v926, %v924
        %v1055 = vpack.c.b16 %v927, %v925
        %v1056 = vpack.c.b16 %v930, %v928
        %v1057 = vpack.c.b16 %v931, %v929
        %v1058 = vpack.c.b16 %v932, %v932
        %v1059 = vpack.c.b16 %v933, %v933
        %vm1184 = vcmask 850944
        %v1186 = vsel %vm1184, %v365, 0
        %v1189 = vsel %vm1184, %v373, 0
        %v1192 = vsel %vm1184, %v381, 0
        %v1195 = vsel %vm1184, %v389, 0
        %v1198 = vsel %vm1184, %v397, 0
        %v1201 = vsel %vm1184, %v405, 0
        %v1204 = vsel %vm1184, %v413, 0
        %v1207 = vsel %vm1184, %v421, 0
        %vm1209 = vcmask 1043456
        %v1211 = vsel %vm1209, %v1058, 0
        %v1214 = vsel %vm1209, %v1059, 0
        %1216 = vmatprep.subr.bf16.mxu0 %v949
        %1217 = vmatpush1.bf16.msra.mxu0 %v948
        %1218 = vmatprep.subr.bf16.mxu0 %v947
        %1219 = vmatpush1.bf16.msra.mxu0 %v946
        %1220 = vmatprep.subr.bf16.mxu0 %v945
        %1221 = vmatpush1.bf16.msra.mxu0 %v944
        %1222 = vmatprep.subr.bf16.mxu0 %v943
        %1223 = vmatpush1.bf16.msra.mxu0 %v942
        %1224 = vmatprep.subr.bf16.mxu0 %v941
        %1225 = vmatpush1.bf16.msra.mxu0 %v940
        %1226 = vmatprep.subr.bf16.mxu0 %v939
        %1227 = vmatpush1.bf16.msra.mxu0 %v938
        %1228 = vmatprep.subr.bf16.mxu0 %v937
        %1229 = vmatpush1.bf16.msra.mxu0 %v936
        %1230 = vmatprep.subr.bf16.mxu0 %v935
        %1231 = vmatpush1.bf16.msra.mxu0 %v934
        %1232 = vmatprep.subr.bf16.mxu0 %v965
        %1233 = vmatpush2.bf16.msra.mxu0 %v964
        %1234 = vmatprep.subr.bf16.mxu0 %v963
        %1235 = vmatpush2.bf16.msra.mxu0 %v962
        %1236 = vmatprep.subr.bf16.mxu0 %v961
        %1237 = vmatpush2.bf16.msra.mxu0 %v960
        %1238 = vmatprep.subr.bf16.mxu0 %v959
        %1239 = vmatpush2.bf16.msra.mxu0 %v958
        %1240 = vmatprep.subr.bf16.mxu0 %v957
        %1241 = vmatpush2.bf16.msra.mxu0 %v956
        %1242 = vmatprep.subr.bf16.mxu0 %v955
        %1243 = vmatpush2.bf16.msra.mxu0 %v954
        %1244 = vmatprep.subr.bf16.mxu0 %v953
        %1245 = vmatpush2.bf16.msra.mxu0 %v952
        %1246 = vmatprep.subr.bf16.mxu0 %v951
        %1247 = vmatpush2.bf16.msra.mxu0 %v950
        %1248 = vmatprep.mubr.bf16.mxu0 %v359
        %1249 = vmatmul.mubr.bf16.gmra.mxu0 %v358
        %v1250 = vpop.f32.mrf.mxu0
        %v1251 = vadd.f32 %v552, %v1250
        %v1252 = vpop.f32.mrf.mxu0
        %v1253 = vadd.f32 %v556, %v1252
        %v1254 = vpop.f32.mrf.mxu0
        %v1255 = vadd.f32 %v552, %v1254
        %v1256 = vpop.f32.mrf.mxu0
        %v1257 = vadd.f32 %v556, %v1256
        %1258 = vmatprep.mubr.bf16.mxu0 %v367
        %1259 = vmatmul.mubr.bf16.gmra.mxu0 %v366
        %v1260 = vpop.f32.mrf.mxu0
        %v1261 = vadd.f32 %v552, %v1260
        %v1262 = vpop.f32.mrf.mxu0
        %v1263 = vadd.f32 %v556, %v1262
        %v1264 = vpop.f32.mrf.mxu0
        %v1265 = vadd.f32 %v552, %v1264
        %v1266 = vpop.f32.mrf.mxu0
        %v1267 = vadd.f32 %v556, %v1266
        %1268 = vmatprep.mubr.bf16.mxu0 %v375
        %1269 = vmatmul.mubr.bf16.gmra.mxu0 %v374
        %v1270 = vpop.f32.mrf.mxu0
        %v1271 = vadd.f32 %v552, %v1270
        %v1272 = vpop.f32.mrf.mxu0
        %v1273 = vadd.f32 %v556, %v1272
        %v1274 = vpop.f32.mrf.mxu0
        %v1275 = vadd.f32 %v552, %v1274
        %v1276 = vpop.f32.mrf.mxu0
        %v1277 = vadd.f32 %v556, %v1276
        %1278 = vmatprep.mubr.bf16.mxu0 %v383
        %1279 = vmatmul.mubr.bf16.gmra.mxu0 %v382
        %v1280 = vpop.f32.mrf.mxu0
        %v1281 = vadd.f32 %v552, %v1280
        %v1282 = vpop.f32.mrf.mxu0
        %v1283 = vadd.f32 %v556, %v1282
        %v1284 = vpop.f32.mrf.mxu0
        %v1285 = vadd.f32 %v552, %v1284
        %v1286 = vpop.f32.mrf.mxu0
        %v1287 = vadd.f32 %v556, %v1286
        %1288 = vmatprep.mubr.bf16.mxu0 %v391
        %1289 = vmatmul.mubr.bf16.gmra.mxu0 %v390
        %v1290 = vpop.f32.mrf.mxu0
        %v1291 = vadd.f32 %v552, %v1290
        %v1292 = vpop.f32.mrf.mxu0
        %v1293 = vadd.f32 %v556, %v1292
        %v1294 = vpop.f32.mrf.mxu0
        %v1295 = vadd.f32 %v552, %v1294
        %v1296 = vpop.f32.mrf.mxu0
        %v1297 = vadd.f32 %v556, %v1296
        %1298 = vmatprep.mubr.bf16.mxu0 %v399
        %1299 = vmatmul.mubr.bf16.gmra.mxu0 %v398
        %v1300 = vpop.f32.mrf.mxu0
        %v1301 = vadd.f32 %v552, %v1300
        %v1302 = vpop.f32.mrf.mxu0
        %v1303 = vadd.f32 %v556, %v1302
        %v1304 = vpop.f32.mrf.mxu0
        %v1305 = vadd.f32 %v552, %v1304
        %v1306 = vpop.f32.mrf.mxu0
        %v1307 = vadd.f32 %v556, %v1306
        %1308 = vmatprep.mubr.bf16.mxu0 %v407
        %1309 = vmatmul.mubr.bf16.gmra.mxu0 %v406
        %v1310 = vpop.f32.mrf.mxu0
        %v1311 = vadd.f32 %v552, %v1310
        %v1312 = vpop.f32.mrf.mxu0
        %v1313 = vadd.f32 %v556, %v1312
        %v1314 = vpop.f32.mrf.mxu0
        %v1315 = vadd.f32 %v552, %v1314
        %v1316 = vpop.f32.mrf.mxu0
        %v1317 = vadd.f32 %v556, %v1316
        %1318 = vmatprep.mubr.bf16.mxu0 %v415
        %1319 = vmatmul.mubr.bf16.gmra.mxu0 %v414
        %v1320 = vpop.f32.mrf.mxu0
        %v1321 = vadd.f32 %v552, %v1320
        %v1322 = vpop.f32.mrf.mxu0
        %v1323 = vadd.f32 %v556, %v1322
        %v1324 = vpop.f32.mrf.mxu0
        %v1325 = vadd.f32 %v552, %v1324
        %v1326 = vpop.f32.mrf.mxu0
        %v1327 = vadd.f32 %v556, %v1326
        %1328 = vdwg.mxu0
        %1329 = vmatprep.subr.bf16.mxu0 %v981
        %1330 = vmatpush1.bf16.msra.mxu0 %v980
        %1331 = vmatprep.subr.bf16.mxu0 %v979
        %1332 = vmatpush1.bf16.msra.mxu0 %v978
        %1333 = vmatprep.subr.bf16.mxu0 %v977
        %1334 = vmatpush1.bf16.msra.mxu0 %v976
        %1335 = vmatprep.subr.bf16.mxu0 %v975
        %1336 = vmatpush1.bf16.msra.mxu0 %v974
        %1337 = vmatprep.subr.bf16.mxu0 %v973
        %1338 = vmatpush1.bf16.msra.mxu0 %v972
        %1339 = vmatprep.subr.bf16.mxu0 %v971
        %1340 = vmatpush1.bf16.msra.mxu0 %v970
        %1341 = vmatprep.subr.bf16.mxu0 %v969
        %1342 = vmatpush1.bf16.msra.mxu0 %v968
        %1343 = vmatprep.subr.bf16.mxu0 %v967
        %1344 = vmatpush1.bf16.msra.mxu0 %v966
        %1345 = vmatprep.subr.bf16.mxu0 %v997
        %1346 = vmatpush2.bf16.msra.mxu0 %v996
        %1347 = vmatprep.subr.bf16.mxu0 %v995
        %1348 = vmatpush2.bf16.msra.mxu0 %v994
        %1349 = vmatprep.subr.bf16.mxu0 %v993
        %1350 = vmatpush2.bf16.msra.mxu0 %v992
        %1351 = vmatprep.subr.bf16.mxu0 %v991
        %1352 = vmatpush2.bf16.msra.mxu0 %v990
        %1353 = vmatprep.subr.bf16.mxu0 %v989
        %1354 = vmatpush2.bf16.msra.mxu0 %v988
        %1355 = vmatprep.subr.bf16.mxu0 %v987
        %1356 = vmatpush2.bf16.msra.mxu0 %v986
        %1357 = vmatprep.subr.bf16.mxu0 %v985
        %1358 = vmatpush2.bf16.msra.mxu0 %v984
        %1359 = vmatprep.subr.bf16.mxu0 %v983
        %1360 = vmatpush2.bf16.msra.mxu0 %v982
        %1361 = vmatprep.mubr.bf16.mxu0 %v361
        %1362 = vmatmul.mubr.bf16.gmra.mxu0 %v360
        %v1363 = vpop.f32.mrf.mxu0
        %v1364 = vadd.f32 %v1251, %v1363
        %v1365 = vpop.f32.mrf.mxu0
        %v1366 = vadd.f32 %v1253, %v1365
        %v1367 = vpop.f32.mrf.mxu0
        %v1368 = vadd.f32 %v1255, %v1367
        %v1369 = vpop.f32.mrf.mxu0
        %v1370 = vadd.f32 %v1257, %v1369
        %1371 = vmatprep.mubr.bf16.mxu0 %v369
        %1372 = vmatmul.mubr.bf16.gmra.mxu0 %v368
        %v1373 = vpop.f32.mrf.mxu0
        %v1374 = vadd.f32 %v1261, %v1373
        %v1375 = vpop.f32.mrf.mxu0
        %v1376 = vadd.f32 %v1263, %v1375
        %v1377 = vpop.f32.mrf.mxu0
        %v1378 = vadd.f32 %v1265, %v1377
        %v1379 = vpop.f32.mrf.mxu0
        %v1380 = vadd.f32 %v1267, %v1379
        %1381 = vmatprep.mubr.bf16.mxu0 %v377
        %1382 = vmatmul.mubr.bf16.gmra.mxu0 %v376
        %v1383 = vpop.f32.mrf.mxu0
        %v1384 = vadd.f32 %v1271, %v1383
        %v1385 = vpop.f32.mrf.mxu0
        %v1386 = vadd.f32 %v1273, %v1385
        %v1387 = vpop.f32.mrf.mxu0
        %v1388 = vadd.f32 %v1275, %v1387
        %v1389 = vpop.f32.mrf.mxu0
        %v1390 = vadd.f32 %v1277, %v1389
        %1391 = vmatprep.mubr.bf16.mxu0 %v385
        %1392 = vmatmul.mubr.bf16.gmra.mxu0 %v384
        %v1393 = vpop.f32.mrf.mxu0
        %v1394 = vadd.f32 %v1281, %v1393
        %v1395 = vpop.f32.mrf.mxu0
        %v1396 = vadd.f32 %v1283, %v1395
        %v1397 = vpop.f32.mrf.mxu0
        %v1398 = vadd.f32 %v1285, %v1397
        %v1399 = vpop.f32.mrf.mxu0
        %v1400 = vadd.f32 %v1287, %v1399
        %1401 = vmatprep.mubr.bf16.mxu0 %v393
        %1402 = vmatmul.mubr.bf16.gmra.mxu0 %v392
        %v1403 = vpop.f32.mrf.mxu0
        %v1404 = vadd.f32 %v1291, %v1403
        %v1405 = vpop.f32.mrf.mxu0
        %v1406 = vadd.f32 %v1293, %v1405
        %v1407 = vpop.f32.mrf.mxu0
        %v1408 = vadd.f32 %v1295, %v1407
        %v1409 = vpop.f32.mrf.mxu0
        %v1410 = vadd.f32 %v1297, %v1409
        %1411 = vmatprep.mubr.bf16.mxu0 %v401
        %1412 = vmatmul.mubr.bf16.gmra.mxu0 %v400
        %v1413 = vpop.f32.mrf.mxu0
        %v1414 = vadd.f32 %v1301, %v1413
        %v1415 = vpop.f32.mrf.mxu0
        %v1416 = vadd.f32 %v1303, %v1415
        %v1417 = vpop.f32.mrf.mxu0
        %v1418 = vadd.f32 %v1305, %v1417
        %v1419 = vpop.f32.mrf.mxu0
        %v1420 = vadd.f32 %v1307, %v1419
        %1421 = vmatprep.mubr.bf16.mxu0 %v409
        %1422 = vmatmul.mubr.bf16.gmra.mxu0 %v408
        %v1423 = vpop.f32.mrf.mxu0
        %v1424 = vadd.f32 %v1311, %v1423
        %v1425 = vpop.f32.mrf.mxu0
        %v1426 = vadd.f32 %v1313, %v1425
        %v1427 = vpop.f32.mrf.mxu0
        %v1428 = vadd.f32 %v1315, %v1427
        %v1429 = vpop.f32.mrf.mxu0
        %v1430 = vadd.f32 %v1317, %v1429
        %1431 = vmatprep.mubr.bf16.mxu0 %v417
        %1432 = vmatmul.mubr.bf16.gmra.mxu0 %v416
        %v1433 = vpop.f32.mrf.mxu0
        %v1434 = vadd.f32 %v1321, %v1433
        %v1435 = vpop.f32.mrf.mxu0
        %v1436 = vadd.f32 %v1323, %v1435
        %v1437 = vpop.f32.mrf.mxu0
        %v1438 = vadd.f32 %v1325, %v1437
        %v1439 = vpop.f32.mrf.mxu0
        %v1440 = vadd.f32 %v1327, %v1439
        %1441 = vdwg.mxu0
        %1442 = vmatprep.subr.bf16.mxu0 %v1013
        %1443 = vmatpush1.bf16.msra.mxu0 %v1012
        %1444 = vmatprep.subr.bf16.mxu0 %v1011
        %1445 = vmatpush1.bf16.msra.mxu0 %v1010
        %1446 = vmatprep.subr.bf16.mxu0 %v1009
        %1447 = vmatpush1.bf16.msra.mxu0 %v1008
        %1448 = vmatprep.subr.bf16.mxu0 %v1007
        %1449 = vmatpush1.bf16.msra.mxu0 %v1006
        %1450 = vmatprep.subr.bf16.mxu0 %v1005
        %1451 = vmatpush1.bf16.msra.mxu0 %v1004
        %1452 = vmatprep.subr.bf16.mxu0 %v1003
        %1453 = vmatpush1.bf16.msra.mxu0 %v1002
        %1454 = vmatprep.subr.bf16.mxu0 %v1001
        %1455 = vmatpush1.bf16.msra.mxu0 %v1000
        %1456 = vmatprep.subr.bf16.mxu0 %v999
        %1457 = vmatpush1.bf16.msra.mxu0 %v998
        %1458 = vmatprep.subr.bf16.mxu0 %v1029
        %1459 = vmatpush2.bf16.msra.mxu0 %v1028
        %1460 = vmatprep.subr.bf16.mxu0 %v1027
        %1461 = vmatpush2.bf16.msra.mxu0 %v1026
        %1462 = vmatprep.subr.bf16.mxu0 %v1025
        %1463 = vmatpush2.bf16.msra.mxu0 %v1024
        %1464 = vmatprep.subr.bf16.mxu0 %v1023
        %1465 = vmatpush2.bf16.msra.mxu0 %v1022
        %1466 = vmatprep.subr.bf16.mxu0 %v1021
        %1467 = vmatpush2.bf16.msra.mxu0 %v1020
        %1468 = vmatprep.subr.bf16.mxu0 %v1019
        %1469 = vmatpush2.bf16.msra.mxu0 %v1018
        %1470 = vmatprep.subr.bf16.mxu0 %v1017
        %1471 = vmatpush2.bf16.msra.mxu0 %v1016
        %1472 = vmatprep.subr.bf16.mxu0 %v1015
        %1473 = vmatpush2.bf16.msra.mxu0 %v1014
        %1474 = vmatprep.mubr.bf16.mxu0 %v363
        %1475 = vmatmul.mubr.bf16.gmra.mxu0 %v362
        %v1476 = vpop.f32.mrf.mxu0
        %v1477 = vadd.f32 %v1364, %v1476
        %v1478 = vpop.f32.mrf.mxu0
        %v1479 = vadd.f32 %v1366, %v1478
        %v1480 = vpop.f32.mrf.mxu0
        %v1481 = vadd.f32 %v1368, %v1480
        %v1482 = vpop.f32.mrf.mxu0
        %v1483 = vadd.f32 %v1370, %v1482
        %1484 = vmatprep.mubr.bf16.mxu0 %v371
        %1485 = vmatmul.mubr.bf16.gmra.mxu0 %v370
        %v1486 = vpop.f32.mrf.mxu0
        %v1487 = vadd.f32 %v1374, %v1486
        %v1488 = vpop.f32.mrf.mxu0
        %v1489 = vadd.f32 %v1376, %v1488
        %v1490 = vpop.f32.mrf.mxu0
        %v1491 = vadd.f32 %v1378, %v1490
        %v1492 = vpop.f32.mrf.mxu0
        %v1493 = vadd.f32 %v1380, %v1492
        %1494 = vmatprep.mubr.bf16.mxu0 %v379
        %1495 = vmatmul.mubr.bf16.gmra.mxu0 %v378
        %v1496 = vpop.f32.mrf.mxu0
        %v1497 = vadd.f32 %v1384, %v1496
        %v1498 = vpop.f32.mrf.mxu0
        %v1499 = vadd.f32 %v1386, %v1498
        %v1500 = vpop.f32.mrf.mxu0
        %v1501 = vadd.f32 %v1388, %v1500
        %v1502 = vpop.f32.mrf.mxu0
        %v1503 = vadd.f32 %v1390, %v1502
        %1504 = vmatprep.mubr.bf16.mxu0 %v387
        %1505 = vmatmul.mubr.bf16.gmra.mxu0 %v386
        %v1506 = vpop.f32.mrf.mxu0
        %v1507 = vadd.f32 %v1394, %v1506
        %v1508 = vpop.f32.mrf.mxu0
        %v1509 = vadd.f32 %v1396, %v1508
        %v1510 = vpop.f32.mrf.mxu0
        %v1511 = vadd.f32 %v1398, %v1510
        %v1512 = vpop.f32.mrf.mxu0
        %v1513 = vadd.f32 %v1400, %v1512
        %1514 = vmatprep.mubr.bf16.mxu0 %v395
        %1515 = vmatmul.mubr.bf16.gmra.mxu0 %v394
        %v1516 = vpop.f32.mrf.mxu0
        %v1517 = vadd.f32 %v1404, %v1516
        %v1518 = vpop.f32.mrf.mxu0
        %v1519 = vadd.f32 %v1406, %v1518
        %v1520 = vpop.f32.mrf.mxu0
        %v1521 = vadd.f32 %v1408, %v1520
        %v1522 = vpop.f32.mrf.mxu0
        %v1523 = vadd.f32 %v1410, %v1522
        %1524 = vmatprep.mubr.bf16.mxu0 %v403
        %1525 = vmatmul.mubr.bf16.gmra.mxu0 %v402
        %v1526 = vpop.f32.mrf.mxu0
        %v1527 = vadd.f32 %v1414, %v1526
        %v1528 = vpop.f32.mrf.mxu0
        %v1529 = vadd.f32 %v1416, %v1528
        %v1530 = vpop.f32.mrf.mxu0
        %v1531 = vadd.f32 %v1418, %v1530
        %v1532 = vpop.f32.mrf.mxu0
        %v1533 = vadd.f32 %v1420, %v1532
        %1534 = vmatprep.mubr.bf16.mxu0 %v411
        %1535 = vmatmul.mubr.bf16.gmra.mxu0 %v410
        %v1536 = vpop.f32.mrf.mxu0
        %v1537 = vadd.f32 %v1424, %v1536
        %v1538 = vpop.f32.mrf.mxu0
        %v1539 = vadd.f32 %v1426, %v1538
        %v1540 = vpop.f32.mrf.mxu0
        %v1541 = vadd.f32 %v1428, %v1540
        %v1542 = vpop.f32.mrf.mxu0
        %v1543 = vadd.f32 %v1430, %v1542
        %1544 = vmatprep.mubr.bf16.mxu0 %v419
        %1545 = vmatmul.mubr.bf16.gmra.mxu0 %v418
        %v1546 = vpop.f32.mrf.mxu0
        %v1547 = vadd.f32 %v1434, %v1546
        %v1548 = vpop.f32.mrf.mxu0
        %v1549 = vadd.f32 %v1436, %v1548
        %v1550 = vpop.f32.mrf.mxu0
        %v1551 = vadd.f32 %v1438, %v1550
        %v1552 = vpop.f32.mrf.mxu0
        %v1553 = vadd.f32 %v1440, %v1552
        %1554 = vdwg.mxu0
        %1555 = vmatprep.subr.bf16.mxu0 %v1045
        %1556 = vmatpush1.bf16.msra.mxu0 %v1044
        %1557 = vmatprep.subr.bf16.mxu0 %v1043
        %1558 = vmatpush1.bf16.msra.mxu0 %v1042
        %1559 = vmatprep.subr.bf16.mxu0 %v1041
        %1560 = vmatpush1.bf16.msra.mxu0 %v1040
        %1561 = vmatprep.subr.bf16.mxu0 %v1039
        %1562 = vmatpush1.bf16.msra.mxu0 %v1038
        %1563 = vmatprep.subr.bf16.mxu0 %v1037
        %1564 = vmatpush1.bf16.msra.mxu0 %v1036
        %1565 = vmatprep.subr.bf16.mxu0 %v1035
        %1566 = vmatpush1.bf16.msra.mxu0 %v1034
        %1567 = vmatprep.subr.bf16.mxu0 %v1033
        %1568 = vmatpush1.bf16.msra.mxu0 %v1032
        %1569 = vmatprep.subr.bf16.mxu0 %v1031
        %1570 = vmatpush1.bf16.msra.mxu0 %v1030
        %1571 = vmatprep.subr.bf16.mxu0 0
        %1572 = vmatpush2.bf16.msra.mxu0 0
        %1573 = vmatprep.subr.bf16.mxu0 %v1214
        %1574 = vmatpush2.bf16.msra.mxu0 %v1211
        %1575 = vmatprep.subr.bf16.mxu0 %v1057
        %1576 = vmatpush2.bf16.msra.mxu0 %v1056
        %1577 = vmatprep.subr.bf16.mxu0 %v1055
        %1578 = vmatpush2.bf16.msra.mxu0 %v1054
        %1579 = vmatprep.subr.bf16.mxu0 %v1053
        %1580 = vmatpush2.bf16.msra.mxu0 %v1052
        %1581 = vmatprep.subr.bf16.mxu0 %v1051
        %1582 = vmatpush2.bf16.msra.mxu0 %v1050
        %1583 = vmatprep.subr.bf16.mxu0 %v1049
        %1584 = vmatpush2.bf16.msra.mxu0 %v1048
        %1585 = vmatprep.subr.bf16.mxu0 %v1047
        %1586 = vmatpush2.bf16.msra.mxu0 %v1046
        %1587 = vmatprep.mubr.bf16.mxu0 %v1186
        %1588 = vmatmul.mubr.bf16.gmra.mxu0 %v364
        %v1589 = vpop.f32.mrf.mxu0
        %v1590 = vadd.f32 %v1477, %v1589
        %v1591 = vpop.f32.mrf.mxu0
        %v1592 = vadd.f32 %v1479, %v1591
        %v1593 = vpop.f32.mrf.mxu0
        %v1594 = vadd.f32 %v1481, %v1593
        %v1595 = vpop.f32.mrf.mxu0
        %v1596 = vadd.f32 %v1483, %v1595
        %1597 = vmatprep.mubr.bf16.mxu0 %v1189
        %1598 = vmatmul.mubr.bf16.gmra.mxu0 %v372
        %v1599 = vpop.f32.mrf.mxu0
        %v1600 = vadd.f32 %v1487, %v1599
        %v1601 = vpop.f32.mrf.mxu0
        %v1602 = vadd.f32 %v1489, %v1601
        %v1603 = vpop.f32.mrf.mxu0
        %v1604 = vadd.f32 %v1491, %v1603
        %v1605 = vpop.f32.mrf.mxu0
        %v1606 = vadd.f32 %v1493, %v1605
        %1607 = vmatprep.mubr.bf16.mxu0 %v1192
        %1608 = vmatmul.mubr.bf16.gmra.mxu0 %v380
        %v1609 = vpop.f32.mrf.mxu0
        %v1610 = vadd.f32 %v1497, %v1609
        %v1611 = vpop.f32.mrf.mxu0
        %v1612 = vadd.f32 %v1499, %v1611
        %v1613 = vpop.f32.mrf.mxu0
        %v1614 = vadd.f32 %v1501, %v1613
        %v1615 = vpop.f32.mrf.mxu0
        %v1616 = vadd.f32 %v1503, %v1615
        %1617 = vmatprep.mubr.bf16.mxu0 %v1195
        %1618 = vmatmul.mubr.bf16.gmra.mxu0 %v388
        %v1619 = vpop.f32.mrf.mxu0
        %v1620 = vadd.f32 %v1507, %v1619
        %v1621 = vpop.f32.mrf.mxu0
        %v1622 = vadd.f32 %v1509, %v1621
        %v1623 = vpop.f32.mrf.mxu0
        %v1624 = vadd.f32 %v1511, %v1623
        %v1625 = vpop.f32.mrf.mxu0
        %v1626 = vadd.f32 %v1513, %v1625
        %1627 = vmatprep.mubr.bf16.mxu0 %v1198
        %1628 = vmatmul.mubr.bf16.gmra.mxu0 %v396
        %v1629 = vpop.f32.mrf.mxu0
        %v1630 = vadd.f32 %v1517, %v1629
        %v1631 = vpop.f32.mrf.mxu0
        %v1632 = vadd.f32 %v1519, %v1631
        %v1633 = vpop.f32.mrf.mxu0
        %v1634 = vadd.f32 %v1521, %v1633
        %v1635 = vpop.f32.mrf.mxu0
        %v1636 = vadd.f32 %v1523, %v1635
        %1637 = vmatprep.mubr.bf16.mxu0 %v1201
        %1638 = vmatmul.mubr.bf16.gmra.mxu0 %v404
        %v1639 = vpop.f32.mrf.mxu0
        %v1640 = vadd.f32 %v1527, %v1639
        %v1641 = vpop.f32.mrf.mxu0
        %v1642 = vadd.f32 %v1529, %v1641
        %v1643 = vpop.f32.mrf.mxu0
        %v1644 = vadd.f32 %v1531, %v1643
        %v1645 = vpop.f32.mrf.mxu0
        %v1646 = vadd.f32 %v1533, %v1645
        %1647 = vmatprep.mubr.bf16.mxu0 %v1204
        %1648 = vmatmul.mubr.bf16.gmra.mxu0 %v412
        %v1649 = vpop.f32.mrf.mxu0
        %v1650 = vadd.f32 %v1537, %v1649
        %v1651 = vpop.f32.mrf.mxu0
        %v1652 = vadd.f32 %v1539, %v1651
        %v1653 = vpop.f32.mrf.mxu0
        %v1654 = vadd.f32 %v1541, %v1653
        %v1655 = vpop.f32.mrf.mxu0
        %v1656 = vadd.f32 %v1543, %v1655
        %1657 = vmatprep.mubr.bf16.mxu0 %v1207
        %1658 = vmatmul.mubr.bf16.gmra.mxu0 %v420
        %v1659 = vpop.f32.mrf.mxu0
        %v1660 = vadd.f32 %v1547, %v1659
        %v1661 = vpop.f32.mrf.mxu0
        %v1662 = vadd.f32 %v1549, %v1661
        %v1663 = vpop.f32.mrf.mxu0
        %v1664 = vadd.f32 %v1551, %v1663
        %v1665 = vpop.f32.mrf.mxu0
        %v1666 = vadd.f32 %v1553, %v1665
        %1667 = vdwg.mxu0
        %v1668 = vmax.f32 %v1590, 0.0
        %v1669 = vmax.f32 %v1592, 0.0
        %v1670 = vmax.f32 %v1594, 0.0
        %v1671 = vmax.f32 %v1596, 0.0
        %v1672 = vmax.f32 %v1600, 0.0
        %v1673 = vmax.f32 %v1602, 0.0
        %v1674 = vmax.f32 %v1604, 0.0
        %v1675 = vmax.f32 %v1606, 0.0
        %v1676 = vmax.f32 %v1610, 0.0
        %v1677 = vmax.f32 %v1612, 0.0
        %v1678 = vmax.f32 %v1614, 0.0
        %v1679 = vmax.f32 %v1616, 0.0
        %v1680 = vmax.f32 %v1620, 0.0
        %v1681 = vmax.f32 %v1622, 0.0
        %v1682 = vmax.f32 %v1624, 0.0
        %v1683 = vmax.f32 %v1626, 0.0
        %v1684 = vmax.f32 %v1630, 0.0
        %v1685 = vmax.f32 %v1632, 0.0
        %v1686 = vmax.f32 %v1634, 0.0
        %v1687 = vmax.f32 %v1636, 0.0
        %v1688 = vmax.f32 %v1640, 0.0
        %v1689 = vmax.f32 %v1642, 0.0
        %v1690 = vmax.f32 %v1644, 0.0
        %v1691 = vmax.f32 %v1646, 0.0
        %v1692 = vmax.f32 %v1650, 0.0
        %v1693 = vmax.f32 %v1652, 0.0
        %v1694 = vmax.f32 %v1654, 0.0
        %v1695 = vmax.f32 %v1656, 0.0
        %v1696 = vmax.f32 %v1660, 0.0
        %v1697 = vmax.f32 %v1662, 0.0
        %v1698 = vmax.f32 %v1664, 0.0
        %v1699 = vmax.f32 %v1666, 0.0
        %v1700 = vpack.c.bf16 %v1670, %v1668
        %v1701 = vpack.c.bf16 %v1671, %v1669
        %v1702 = vpack.c.bf16 %v1674, %v1672
        %v1703 = vpack.c.bf16 %v1675, %v1673
        %v1704 = vpack.c.bf16 %v1678, %v1676
        %v1705 = vpack.c.bf16 %v1679, %v1677
        %v1706 = vpack.c.bf16 %v1682, %v1680
        %v1707 = vpack.c.bf16 %v1683, %v1681
        %v1708 = vpack.c.bf16 %v1686, %v1684
        %v1709 = vpack.c.bf16 %v1687, %v1685
        %v1710 = vpack.c.bf16 %v1690, %v1688
        %v1711 = vpack.c.bf16 %v1691, %v1689
        %v1712 = vpack.c.bf16 %v1694, %v1692
        %v1713 = vpack.c.bf16 %v1695, %v1693
        %v1714 = vpack.c.bf16 %v1698, %v1696
        %v1715 = vpack.c.bf16 %v1699, %v1697
        %v1716 = vld [vmem:[%s3] sm:$0xf]
        %v1717 = vld [vmem:[%s3 + $0x4] sm:$0xf]
        %v1718 = vld [vmem:[%s3 + $0x8] sm:$0xf]
        %v1719 = vld [vmem:[%s3 + $0xc] sm:$0xf]
        %v1720 = vld [vmem:[%s3 + $0x10] sm:$0xf]
        %v1721 = vld [vmem:[%s3 + $0x14] sm:$0xf]
        %v1722 = vld [vmem:[%s3 + $0x18] sm:$0xf]
        %v1723 = vld [vmem:[%s3 + $0x1c] sm:$0xf]
        %v1724 = vld [vmem:[%s3 + $0x20] sm:$0xf]
        %v1725 = vld [vmem:[%s3 + $0x24] sm:$0xf]
        %v1726 = vld [vmem:[%s3 + $0x28] sm:$0xf]
        %v1727 = vld [vmem:[%s3 + $0x2c] sm:$0xf]
        %v1728 = vld [vmem:[%s3 + $0x30] sm:$0xf]
        %v1729 = vld [vmem:[%s3 + $0x34] sm:$0xf]
        %v1730 = vld [vmem:[%s3 + $0x38] sm:$0xf]
        %v1731 = vld [vmem:[%s3 + $0x3c] sm:$0xf]
        %v1732 = vld [vmem:[%s3 + $0x40] sm:$0xf]
        %v1733 = vld [vmem:[%s3 + $0x44] sm:$0xf]
        %v1734 = vld [vmem:[%s3 + $0x48] sm:$0xf]
        %v1735 = vld [vmem:[%s3 + $0x4c] sm:$0xf]
        %v1736 = vld [vmem:[%s3 + $0x50] sm:$0xf]
        %v1737 = vld [vmem:[%s3 + $0x54] sm:$0xf]
        %v1738 = vld [vmem:[%s3 + $0x58] sm:$0xf]
        %v1739 = vld [vmem:[%s3 + $0x5c] sm:$0xf]
        %v1740 = vld [vmem:[%s3 + $0x60] sm:$0xf]
        %v1741 = vld [vmem:[%s3 + $0x64] sm:$0xf]
        %v1742 = vld [vmem:[%s3 + $0x68] sm:$0xf]
        %v1743 = vld [vmem:[%s3 + $0x6c] sm:$0xf]
        %v1744 = vld [vmem:[%s3 + $0x70] sm:$0xf]
        %v1745 = vld [vmem:[%s3 + $0x74] sm:$0xf]
        %v1746 = vld [vmem:[%s3 + $0x78] sm:$0xf]
        %v1747 = vld [vmem:[%s3 + $0x7c] sm:$0xf]
        %v1748 = vld [vmem:[%s4] sm:$0x1]
        %v1750 = vlaneseq
        %v1751 = vshrl.u32 %v1750, 7
        %v1752 = vsub.s32 0, %v1751
        %v1753 = vrot.slane %v1748, %v1752
        %v1787 = vunpack.c.l.b16 %v1716
        %v1788 = vunpack.c.l.b16 %v1717
        %v1789 = vunpack.c.l.b16 %v1718
        %v1790 = vunpack.c.l.b16 %v1719
        %v1791 = vunpack.c.l.b16 %v1720
        %v1792 = vunpack.c.l.b16 %v1721
        %v1793 = vunpack.c.l.b16 %v1722
        %v1794 = vunpack.c.l.b16 %v1723
        %v1795 = vunpack.c.l.b16 %v1724
        %v1796 = vunpack.c.l.b16 %v1725
        %v1797 = vunpack.c.l.b16 %v1726
        %v1798 = vunpack.c.l.b16 %v1727
        %v1799 = vunpack.c.l.b16 %v1728
        %v1800 = vunpack.c.l.b16 %v1729
        %v1801 = vunpack.c.l.b16 %v1730
        %v1802 = vunpack.c.l.b16 %v1731
        %v1803 = vunpack.c.l.b16 %v1732
        %v1804 = vunpack.c.l.b16 %v1733
        %v1805 = vunpack.c.l.b16 %v1734
        %v1806 = vunpack.c.l.b16 %v1735
        %v1807 = vunpack.c.l.b16 %v1736
        %v1808 = vunpack.c.l.b16 %v1737
        %v1809 = vunpack.c.l.b16 %v1738
        %v1810 = vunpack.c.l.b16 %v1739
        %v1811 = vunpack.c.l.b16 %v1740
        %v1812 = vunpack.c.l.b16 %v1741
        %v1813 = vunpack.c.l.b16 %v1742
        %v1814 = vunpack.c.l.b16 %v1743
        %v1815 = vunpack.c.l.b16 %v1744
        %v1816 = vunpack.c.l.b16 %v1745
        %v1817 = vunpack.c.l.b16 %v1746
        %v1818 = vunpack.c.l.b16 %v1747
        %v1819 = vpack.c.b16 %v1788, %v1787
        %v1820 = vpack.c.b16 %v1790, %v1789
        %v1821 = vpack.c.b16 %v1792, %v1791
        %v1822 = vpack.c.b16 %v1794, %v1793
        %v1823 = vpack.c.b16 %v1796, %v1795
        %v1824 = vpack.c.b16 %v1798, %v1797
        %v1825 = vpack.c.b16 %v1800, %v1799
        %v1826 = vpack.c.b16 %v1802, %v1801
        %v1827 = vpack.c.b16 %v1804, %v1803
        %v1828 = vpack.c.b16 %v1806, %v1805
        %v1829 = vpack.c.b16 %v1808, %v1807
        %v1830 = vpack.c.b16 %v1810, %v1809
        %v1831 = vpack.c.b16 %v1812, %v1811
        %v1832 = vpack.c.b16 %v1814, %v1813
        %v1833 = vpack.c.b16 %v1816, %v1815
        %v1834 = vpack.c.b16 %v1818, %v1817
        %1851 = vmatprep.subr.bf16.mxu0 0
        %1852 = vmatpush1.bf16.msra.mxu0 %v1826
        %1853 = vmatprep.subr.bf16.mxu0 0
        %1854 = vmatpush1.bf16.msra.mxu0 %v1825
        %1855 = vmatprep.subr.bf16.mxu0 0
        %1856 = vmatpush1.bf16.msra.mxu0 %v1824
        %1857 = vmatprep.subr.bf16.mxu0 0
        %1858 = vmatpush1.bf16.msra.mxu0 %v1823
        %1859 = vmatprep.subr.bf16.mxu0 0
        %1860 = vmatpush1.bf16.msra.mxu0 %v1822
        %1861 = vmatprep.subr.bf16.mxu0 0
        %1862 = vmatpush1.bf16.msra.mxu0 %v1821
        %1863 = vmatprep.subr.bf16.mxu0 0
        %1864 = vmatpush1.bf16.msra.mxu0 %v1820
        %1865 = vmatprep.subr.bf16.mxu0 0
        %1866 = vmatpush1.bf16.msra.mxu0 %v1819
        %1867 = vmatprep.subr.bf16.mxu0 0
        %1868 = vmatpush2.bf16.msra.mxu0 %v1834
        %1869 = vmatprep.subr.bf16.mxu0 0
        %1870 = vmatpush2.bf16.msra.mxu0 %v1833
        %1871 = vmatprep.subr.bf16.mxu0 0
        %1872 = vmatpush2.bf16.msra.mxu0 %v1832
        %1873 = vmatprep.subr.bf16.mxu0 0
        %1874 = vmatpush2.bf16.msra.mxu0 %v1831
        %1875 = vmatprep.subr.bf16.mxu0 0
        %1876 = vmatpush2.bf16.msra.mxu0 %v1830
        %1877 = vmatprep.subr.bf16.mxu0 0
        %1878 = vmatpush2.bf16.msra.mxu0 %v1829
        %1879 = vmatprep.subr.bf16.mxu0 0
        %1880 = vmatpush2.bf16.msra.mxu0 %v1828
        %1881 = vmatprep.subr.bf16.mxu0 0
        %1882 = vmatpush2.bf16.msra.mxu0 %v1827
        %1883 = vmatprep.mubr.bf16.mxu0 %v1701
        %1884 = vmatmul.mubr.bf16.gmra.mxu0 %v1700
        %v1885 = vpop.f32.mrf.mxu0
        %v1886 = vadd.f32 %v1753, %v1885
        %v1887 = vpop.f32.mrf.mxu0
        %v1888 = vpop.f32.mrf.mxu0
        %v1889 = vadd.f32 %v1753, %v1888
        %v1890 = vpop.f32.mrf.mxu0
        %1891 = vmatprep.mubr.bf16.mxu0 %v1703
        %1892 = vmatmul.mubr.bf16.gmra.mxu0 %v1702
        %v1893 = vpop.f32.mrf.mxu0
        %v1894 = vadd.f32 %v1753, %v1893
        %v1895 = vpop.f32.mrf.mxu0
        %v1896 = vpop.f32.mrf.mxu0
        %v1897 = vadd.f32 %v1753, %v1896
        %v1898 = vpop.f32.mrf.mxu0
        %1899 = vmatprep.mubr.bf16.mxu0 %v1705
        %1900 = vmatmul.mubr.bf16.gmra.mxu0 %v1704
        %v1901 = vpop.f32.mrf.mxu0
        %v1902 = vadd.f32 %v1753, %v1901
        %v1903 = vpop.f32.mrf.mxu0
        %v1904 = vpop.f32.mrf.mxu0
        %v1905 = vadd.f32 %v1753, %v1904
        %v1906 = vpop.f32.mrf.mxu0
        %1907 = vmatprep.mubr.bf16.mxu0 %v1707
        %1908 = vmatmul.mubr.bf16.gmra.mxu0 %v1706
        %v1909 = vpop.f32.mrf.mxu0
        %v1910 = vadd.f32 %v1753, %v1909
        %v1911 = vpop.f32.mrf.mxu0
        %v1912 = vpop.f32.mrf.mxu0
        %v1913 = vadd.f32 %v1753, %v1912
        %v1914 = vpop.f32.mrf.mxu0
        %1915 = vmatprep.mubr.bf16.mxu0 %v1709
        %1916 = vmatmul.mubr.bf16.gmra.mxu0 %v1708
        %v1917 = vpop.f32.mrf.mxu0
        %v1918 = vadd.f32 %v1753, %v1917
        %v1919 = vpop.f32.mrf.mxu0
        %v1920 = vpop.f32.mrf.mxu0
        %v1921 = vadd.f32 %v1753, %v1920
        %v1922 = vpop.f32.mrf.mxu0
        %1923 = vmatprep.mubr.bf16.mxu0 %v1711
        %1924 = vmatmul.mubr.bf16.gmra.mxu0 %v1710
        %v1925 = vpop.f32.mrf.mxu0
        %v1926 = vadd.f32 %v1753, %v1925
        %v1927 = vpop.f32.mrf.mxu0
        %v1928 = vpop.f32.mrf.mxu0
        %v1929 = vadd.f32 %v1753, %v1928
        %v1930 = vpop.f32.mrf.mxu0
        %1931 = vmatprep.mubr.bf16.mxu0 %v1713
        %1932 = vmatmul.mubr.bf16.gmra.mxu0 %v1712
        %v1933 = vpop.f32.mrf.mxu0
        %v1934 = vadd.f32 %v1753, %v1933
        %v1935 = vpop.f32.mrf.mxu0
        %v1936 = vpop.f32.mrf.mxu0
        %v1937 = vadd.f32 %v1753, %v1936
        %v1938 = vpop.f32.mrf.mxu0
        %1939 = vmatprep.mubr.bf16.mxu0 %v1715
        %1940 = vmatmul.mubr.bf16.gmra.mxu0 %v1714
        %v1941 = vpop.f32.mrf.mxu0
        %v1942 = vadd.f32 %v1753, %v1941
        %v1943 = vpop.f32.mrf.mxu0
        %v1944 = vpop.f32.mrf.mxu0
        %v1945 = vadd.f32 %v1753, %v1944
        %v1946 = vpop.f32.mrf.mxu0
        %1947 = vdwg.mxu0
        %1948 = vst [vmem:[%s220] sm:$0xff] %v1886
        %1949 = vst [vmem:[%s220 + $0x8] sm:$0xff] %v1889
        %1950 = vst [vmem:[%s220 + $0x10] sm:$0xff] %v1894
        %1951 = vst [vmem:[%s220 + $0x18] sm:$0xff] %v1897
        %1952 = vst [vmem:[%s220 + $0x20] sm:$0xff] %v1902
        %1953 = vst [vmem:[%s220 + $0x28] sm:$0xff] %v1905
        %1954 = vst [vmem:[%s220 + $0x30] sm:$0xff] %v1910
        %1955 = vst [vmem:[%s220 + $0x38] sm:$0xff] %v1913
        %1956 = vst [vmem:[%s220 + $0x40] sm:$0xff] %v1918
        %1957 = vst [vmem:[%s220 + $0x48] sm:$0xff] %v1921
        %1958 = vst [vmem:[%s220 + $0x50] sm:$0xff] %v1926
        %1959 = vst [vmem:[%s220 + $0x58] sm:$0xff] %v1929
        %1960 = vst [vmem:[%s220 + $0x60] sm:$0xff] %v1934
        %1961 = vst [vmem:[%s220 + $0x68] sm:$0xff] %v1937
        %1962 = vst [vmem:[%s220 + $0x70] sm:$0xff] %v1942
        %1963 = vst [vmem:[%s220 + $0x78] sm:$0xff] %v1945
        %s1964 = sand.u32 %s137, 1
        %s1965 = scalar_lea.sflag [#allocation3], %s1964
        %s1966 = sand.u32 %s137, 1
        %s1967 = smul.addr %s1966, 128
        %s1968 = scalar_lea.vmem [#allocation2], %s1967
        // Predicated region
        $region41: #{tpu_custom_call.1} parent=39 // pred_check
          %p1969 = pneg %p147
        $region42: #{tpu_custom_call.1} parent=39 // pred_check_branch
          %1971 = sbr.rel (%p1969) target = $region44
        $region43: #{tpu_custom_call.1} parent=39 // pred_region
          %s1972 = smul.u32 16, %s19
          %s1974 = ssub.s32 2048, 2048
          %1975 = vsyncadd %s1965, %s1974
          %s1976 = smul.addr %s1972, 128
          %s1977 = scalar_lea.hbm %s5, %s1976
          %s1978 = sshll.u32 %s1968, 4
          %s1979 = int_to_ptr.vmem [resolvable:$true] %s1978
          %1984 = dma.vmem_to_hbm [thread:$0]  %s1979, 2048, %s1977, %s1965, 128, 128, 8
        $region44: #{tpu_custom_call.1} parent=39 // pred_fallthru
          _
      $region40: #{tpu_custom_call.1} parent=5 // pred_fallthru
        _
      %p1985 = scmp.le.s32.totalorder 2, %s14
      // Predicated region
      $region45: #{tpu_custom_call.1} parent=5 // pred_check
        %p1986 = pneg %p1985
      $region46: #{tpu_custom_call.1} parent=5 // pred_check_branch
        %1988 = sbr.rel (%p1986) target = $region48
      $region47: #{tpu_custom_call.1} parent=5 // pred_region
        %s1989 = ssub.s32 %s14, 2
        // Predicated region
        $region49: #{tpu_custom_call.1} parent=47 // pred_check
          %p1990 = pneg %p153
        $region50: #{tpu_custom_call.1} parent=47 // pred_check_branch
          %1992 = sbr.rel (%p1990) target = $region52
        $region51: #{tpu_custom_call.1} parent=47 // pred_region
          %s1993 = sand.u32 %s138, 1
          %s1994 = scalar_lea.sflag [#allocation3], %s1993
          %s1995 = sand.u32 %s138, 1
          %s1996 = smul.addr %s1995, 128
          %s1997 = scalar_lea.vmem [#allocation2], %s1996
          %1998 = dma.done %s1994, 2048
        $region52: #{tpu_custom_call.1} parent=47 // pred_fallthru
          _
      $region48: #{tpu_custom_call.1} parent=5 // pred_fallthru
        _
    $region6: #{tpu_custom_call.1} parent=1 // loop_footer
      %s18 = sadd.s32 1, %s14
    $region7: #{tpu_custom_call.1} parent=1 // loop_footer_branch
      %13 = sbr.rel target = $region3
    $region8: #{tpu_custom_call.1} parent=1 // loop_exit
      _
    %1999 = vsyncpa [#allocation3], 1
    %s2000 = scalar_lea.sflag [#allocation3], 1
    %2001 = vsyncpa %s2000, 1

</llo_original>
